<compile_context>
chip_gen: v5e
topology: v5e:2x2
jax: 0.10.0
libtpu: 0.0.40
codegen_flags: <defaults>
</compile_context>

<pallas_src>
import functools

import jax
import jax.numpy as jnp
from jax.experimental import pallas as pl
from jax.experimental.pallas import tpu as pltpu

_EPS = 1e-12  # matches torch.nn.functional.normalize default


def _nearest_code_kernel(x_ref, cbt_ref, idx_ref, best_ref, bidx_ref):
    """One (row-tile, K-chunk) grid step of the nearest-codebook-entry search.

    x_ref   : (tile_m, D+1)  l2-normalized rows with a trailing column of ones.
    cbt_ref : (D+1, Kc)      normalized codebook chunk^T whose trailing row holds
                             -0.5*||e_n||^2, so the matmul output is the score.
    idx_ref : (1, 1, tile_m) int32 output block (lane-dense), written on last chunk.
    best_ref / bidx_ref : (1, tile_m) running max-score / argmax VMEM scratch.
    """
    k = pl.program_id(1)
    kc = cbt_ref.shape[1]

    @pl.when(k == 0)
    def _init():
        best_ref[...] = jnp.full(best_ref.shape, -jnp.inf, dtype=best_ref.dtype)
        bidx_ref[...] = jnp.zeros(bidx_ref.shape, dtype=bidx_ref.dtype)

    # score[r, c] = x_n[r].e_n[c] - 0.5*||e_n[c]||^2 ; argmax_c == argmin_c ||x_n - e_n||^2
    # (||x_n||^2 is constant per row).
    score = jnp.dot(x_ref[...], cbt_ref[...],
                    preferred_element_type=jnp.float32)             # (tile_m, Kc) on MXU
    local_max = jnp.max(score, axis=-1)[None, :]                    # (1, tile_m)
    local_arg = (jnp.argmax(score, axis=-1).astype(jnp.int32) + k * kc)[None, :]

    better = local_max > best_ref[...]    # strict '>' keeps the earlier chunk on ties
    best_ref[...] = jnp.where(better, local_max, best_ref[...])
    bidx_ref[...] = jnp.where(better, local_arg, bidx_ref[...])

    @pl.when(k == pl.num_programs(1) - 1)
    def _finalize():
        idx_ref[...] = bidx_ref[...][None]                          # (1, 1, tile_m)


def _default_config():
    """Per-TPU-generation (tile_m, k_chunk, vmem_cap_bytes) defaults."""
    try:
        kind = jax.devices()[0].device_kind.lower()
    except Exception:  # pragma: no cover - fall back to conservative defaults
        kind = ""
    if "v7" in kind:
        # 64 MiB physical VMEM: smaller row tile, chunk the codebook axis.
        return 256, 2048, 48 * 1024 * 1024
    if any(tag in kind for tag in ("v4", "v5", "v6")):
        # 128 MiB VMEM: bigger row tile, keep the whole codebook resident.
        return 512, 8192, 96 * 1024 * 1024
    return 256, 2048, 48 * 1024 * 1024


@functools.partial(
    jax.jit,
    static_argnames=("tile_m", "k_chunk", "vmem_cap", "use_bf16_matmul"))
def quantizer_forward(x, codebook, *, tile_m=None, k_chunk=None, vmem_cap=None,
                      use_bf16_matmul=False):
    """x: (B, N, D) float, codebook: (K, D) float.

    Returns (quantized (B,N,D), indices (B,N) int32, quantize_loss scalar f32).
    """
    B, N, D = x.shape
    K, Dk = codebook.shape
    assert D == Dk

    d_tile_m, d_k_chunk, d_vmem_cap = _default_config()
    tile_m = d_tile_m if tile_m is None else tile_m
    k_chunk = d_k_chunk if k_chunk is None else k_chunk
    vmem_cap = d_vmem_cap if vmem_cap is None else vmem_cap
    assert tile_m % 8 == 0

    M = B * N
    num_tiles = pl.cdiv(M, tile_m)
    M_pad = num_tiles * tile_m

    # ---- cheap wrapper-side (O(M*D) / O(K*D)) preprocessing --------------------
    xf = x.astype(jnp.float32)
    x_norm = xf / jnp.maximum(
        jnp.sqrt(jnp.sum(xf * xf, axis=-1, keepdims=True)), _EPS)      # (B, N, D)

    x2d = x_norm.reshape(M, D)
    if M_pad != M:
        x2d = jnp.pad(x2d, ((0, M_pad - M), (0, 0)))   # pad rows sliced off below
    # Ones column so the -0.5*||e_n||^2 bias folds into the distance matmul.
    x_aug = jnp.concatenate([x2d, jnp.ones((M_pad, 1), jnp.float32)], axis=-1)

    cb32 = codebook.astype(jnp.float32)
    cb_norm = cb32 / jnp.maximum(
        jnp.sqrt(jnp.sum(cb32 * cb32, axis=-1, keepdims=True)), _EPS)   # (K, D)
    bias = -0.5 * jnp.sum(cb_norm * cb_norm, axis=-1)                   # (K,)

    if K <= k_chunk:
        kc, num_k = K, 1
        cbt = cb_norm.T                                                 # (D, K)
    else:
        assert k_chunk % 128 == 0, "k_chunk must be lane-aligned (multiple of 128)"
        kc = k_chunk
        num_k = pl.cdiv(K, kc)
        k_pad = num_k * kc
        cbt = jnp.pad(cb_norm.T, ((0, 0), (0, k_pad - K)))
        # Padded columns get a huge negative bias so they can never win the argmax.
        bias = jnp.concatenate(
            [bias, jnp.full((k_pad - K,), -1e30, jnp.float32)])
    cbt_aug = jnp.concatenate([cbt, bias[None, :]], axis=0)             # (D+1, K_pad)

    if use_bf16_matmul:
        # ~3x MXU throughput on the dominant matmul; may flip argmin on near-ties.
        x_aug = x_aug.astype(jnp.bfloat16)
        cbt_aug = cbt_aug.astype(jnp.bfloat16)

    # ---- VMEM budget (double-buffered IO + (tm, Kc) score/argmax temporaries) --
    in_bytes = 2 if use_bf16_matmul else 4
    est = (2 * tile_m * (D + 1) * in_bytes      # x tile, double-buffered
           + 2 * (D + 1) * kc * in_bytes        # codebook chunk, double-buffered
           + 2 * tile_m * 4                     # idx output block, double-buffered
           + 3 * tile_m * kc * 4                # score + argmax iota/compare temps
           + 2 * tile_m * 4)                    # running max / argmax scratch
    est = int(est * 1.5) + (2 << 20)            # headroom for compiler scratch
    vmem_limit = int(min(max(est, 16 * 1024 * 1024), vmem_cap))

    idx3d = pl.pallas_call(
        _nearest_code_kernel,
        out_shape=jax.ShapeDtypeStruct((num_tiles, 1, tile_m), jnp.int32),
        grid_spec=pltpu.PrefetchScalarGridSpec(
            num_scalar_prefetch=0,
            grid=(num_tiles, num_k),                     # reduction (K) axis last
            in_specs=[
                # x tile: block index invariant along k -> DMA'd once per row tile.
                pl.BlockSpec((tile_m, D + 1), lambda i, k: (i, 0)),
                # Codebook: whole thing when num_k == 1 (block index constant ->
                # fetched once for the entire grid), otherwise streamed/pipelined
                # in (D+1, kc) chunks along the inner grid axis.
                pl.BlockSpec((D + 1, kc), lambda i, k: (0, k)),
            ],
            out_specs=pl.BlockSpec((1, 1, tile_m), lambda i, k: (i, 0, 0)),
            scratch_shapes=[
                pltpu.VMEM((1, tile_m), jnp.float32),    # running best score
                pltpu.VMEM((1, tile_m), jnp.int32),      # running argmax
            ],
        ),
        compiler_params=pltpu.CompilerParams(
            # Row-tile axis is embarrassingly parallel; K-chunk axis is a reduction.
            # TODO(synk): on v7x verify "parallel" shards across both TensorCores;
            # switch this axis to pltpu.CORE_PARALLEL if it does not.
            dimension_semantics=("parallel", "arbitrary"),
            vmem_limit_bytes=vmem_limit),
    )(x_aug, cbt_aug)

    indices = idx3d.reshape(M_pad)[:M].reshape(B, N)

    # Gather + loss in the wrapper: small mem-bound XLA ops (O(M*D)) replacing a
    # second (tm,K)@(K,D) matmul, the one-hot build and a lane-sparse store.
    quantized = jnp.take(cb32, indices, axis=0)                 # (B, N, D) raw rows
    mse = jnp.mean(jnp.square(quantized - x_norm))
    quantize_loss = mse + 0.25 * mse      # codebook_loss + commitment_loss
    # Forward value of x_n + (quant - x_n).detach() is just `quantized`;
    # the straight-through gradient rerouting is a training-time concern.
    return quantized.astype(x.dtype), indices, quantize_loss


def _reference_forward(x, codebook):
    eps = 1e-12
    xn = x / jnp.maximum(jnp.linalg.norm(x, axis=-1, keepdims=True), eps)
    en = codebook / jnp.maximum(
        jnp.linalg.norm(codebook, axis=-1, keepdims=True), eps)
    d = jnp.linalg.norm(xn[:, :, None, :] - en[None, None, :, :], axis=-1)
    idx = jnp.argmin(d, axis=-1)
    quant = codebook[idx]
    mse = jnp.mean((quant - xn) ** 2)
    return quant, idx.astype(jnp.int32), 1.25 * mse


if __name__ == "__main__":
    key = jax.random.PRNGKey(0)

    # Configs:
    #  1) M=16  < tile_m  -> exercises row-padding path.
    #  2) M=400           -> default per-device tile_m / single-chunk codebook.
    #  3) tile_m=128, k_chunk=128, K=320 -> multi-row-tile grid + chunked & padded
    #     codebook axis (running max/argmax accumulator path).
    configs = [
        ((2, 8, 32, 64), {}),
        ((2, 200, 32, 64), {}),
        ((2, 200, 32, 320), {"tile_m": 128, "k_chunk": 128}),
    ]
    for (B, N, D, K), overrides in configs:
        key, kx, kc_key = jax.random.split(key, 3)
        x = jax.random.normal(kx, (B, N, D), dtype=jnp.float32)
        # nn.Embedding weight init: uniform(-1/codebook_size, 1/codebook_size)
        codebook = jax.random.uniform(
            kc_key, (K, D), dtype=jnp.float32, minval=-1.0 / K, maxval=1.0 / K)

        quantized, indices, loss = quantizer_forward(x, codebook, **overrides)
        jax.block_until_ready((quantized, indices, loss))

        q_ref, idx_ref, loss_ref = _reference_forward(x, codebook)
        assert bool(jnp.all(indices == idx_ref)), (B, N, D, K)
        assert bool(jnp.allclose(quantized, q_ref, atol=1e-5, rtol=1e-5)), (B, N, D, K)
        assert bool(jnp.allclose(loss, loss_ref, atol=1e-6, rtol=1e-5)), (B, N, D, K)

    print("KERNEL_OK")
</pallas_src>

<mosaic_0001>
module attributes {stable_mosaic.version = 11 : i64} {
  func.func @_nearest_code_kernel(%arg0: i32, %arg1: i32, %arg2: memref<256x33xf32, #tpu.memory_space<vmem>>, %arg3: memref<33x64xf32, #tpu.memory_space<vmem>>, %arg4: memref<1x1x256xi32, #tpu.memory_space<vmem>>, %arg5: memref<1x256xf32, #tpu.memory_space<vmem>>, %arg6: memref<1x256xi32, #tpu.memory_space<vmem>>) attributes {dimension_semantics = [#tpu.dimension_semantics<parallel>, #tpu.dimension_semantics<arbitrary>], iteration_bounds = array<i64: 1, 1>, scalar_prefetch = 0 : i64, scratch_operands = 2 : i64, tpu.core_type = #tpu.core_type<tc>, window_params = [{transform_indices = @transform_0, window_bounds = array<i64: 256, 33>}, {transform_indices = @transform_1, window_bounds = array<i64: 33, 64>}, {transform_indices = @transform_2, window_bounds = array<i64: 1, 1, 256>}]} {
    %c0_i32 = arith.constant 0 : i32
    %0 = arith.cmpi eq, %arg1, %c0_i32 : i32
    %1 = arith.extui %0 : i1 to i32
    %c0_i32_0 = arith.constant 0 : i32
    %2 = arith.cmpi ne, %1, %c0_i32_0 : i32
    scf.if %2 {
      %cst_17 = arith.constant 0xFF800000 : f32
      %24 = vector.broadcast %cst_17 : f32 to vector<1x256xf32>
      %c0_18 = arith.constant 0 : index
      %c0_19 = arith.constant 0 : index
      %25 = vector.load %arg5[%c0_18, %c0_19] : memref<1x256xf32, #tpu.memory_space<vmem>>, vector<1x256xf32>
      tpu.vector_store %arg5[%c0_18, %c0_19], %24 {strides = array<i32>} : memref<1x256xf32, #tpu.memory_space<vmem>>, vector<1x256xf32>,
      %c0_i32_20 = arith.constant 0 : i32
      %26 = vector.broadcast %c0_i32_20 : i32 to vector<1x256xi32>
      %c0_21 = arith.constant 0 : index
      %c0_22 = arith.constant 0 : index
      %27 = vector.load %arg6[%c0_21, %c0_22] : memref<1x256xi32, #tpu.memory_space<vmem>>, vector<1x256xi32>
      tpu.vector_store %arg6[%c0_21, %c0_22], %26 {strides = array<i32>} : memref<1x256xi32, #tpu.memory_space<vmem>>, vector<1x256xi32>,
    } else {
    }
    %c0 = arith.constant 0 : index
    %c0_1 = arith.constant 0 : index
    %3 = vector.load %arg2[%c0, %c0_1] : memref<256x33xf32, #tpu.memory_space<vmem>>, vector<256x33xf32>
    %c0_2 = arith.constant 0 : index
    %c0_3 = arith.constant 0 : index
    %4 = vector.load %arg3[%c0_2, %c0_3] : memref<33x64xf32, #tpu.memory_space<vmem>>, vector<33x64xf32>
    %cst = arith.constant dense<0.000000e+00> : vector<256x64xf32>
    %5 = tpu.matmul %3, %4, %cst {dimension_numbers = #tpu.dot_dimension_numbers<[1], [0], [0], [1], [0, 0, 1, 1], [], []>} : vector<256x33xf32>, vector<33x64xf32>, vector<256x64xf32> -> vector<256x64xf32>
    %cst_4 = arith.constant dense<0xFF800000> : vector<256xf32>
    %6 = vector.multi_reduction <maximumf>, %5, %cst_4 [1] : vector<256x64xf32> to vector<256xf32>
    %7 = vector.shape_cast %6 : vector<256xf32> to vector<1x256xf32>
    %8 = tpu.reduce_index %5 {axis = 1 : i32, kind = #tpu.reduction_kind<arg_max>} : vector<256x64xf32> -> vector<256xi32>
    %c64_i32 = arith.constant 64 : i32
    %9 = arith.muli %arg1, %c64_i32 : i32
    %10 = vector.broadcast %9 : i32 to vector<256xi32>
    %11 = arith.addi %8, %10 : vector<256xi32>
    %12 = vector.shape_cast %11 : vector<256xi32> to vector<1x256xi32>
    %c0_5 = arith.constant 0 : index
    %c0_6 = arith.constant 0 : index
    %13 = vector.load %arg5[%c0_5, %c0_6] : memref<1x256xf32, #tpu.memory_space<vmem>>, vector<1x256xf32>
    %14 = arith.cmpf ogt, %7, %13 : vector<1x256xf32>
    %c0_7 = arith.constant 0 : index
    %c0_8 = arith.constant 0 : index
    %15 = vector.load %arg5[%c0_7, %c0_8] : memref<1x256xf32, #tpu.memory_space<vmem>>, vector<1x256xf32>
    %16 = arith.select %14, %7, %15 : vector<1x256xi1>, vector<1x256xf32>
    %c0_9 = arith.constant 0 : index
    %c0_10 = arith.constant 0 : index
    %17 = vector.load %arg5[%c0_9, %c0_10] : memref<1x256xf32, #tpu.memory_space<vmem>>, vector<1x256xf32>
    tpu.vector_store %arg5[%c0_9, %c0_10], %16 {strides = array<i32>} : memref<1x256xf32, #tpu.memory_space<vmem>>, vector<1x256xf32>,
    %c0_11 = arith.constant 0 : index
    %c0_12 = arith.constant 0 : index
    %18 = vector.load %arg6[%c0_11, %c0_12] : memref<1x256xi32, #tpu.memory_space<vmem>>, vector<1x256xi32>
    %19 = arith.select %14, %12, %18 : vector<1x256xi1>, vector<1x256xi32>
    %c0_13 = arith.constant 0 : index
    %c0_14 = arith.constant 0 : index
    %20 = vector.load %arg6[%c0_13, %c0_14] : memref<1x256xi32, #tpu.memory_space<vmem>>, vector<1x256xi32>
    tpu.vector_store %arg6[%c0_13, %c0_14], %19 {strides = array<i32>} : memref<1x256xi32, #tpu.memory_space<vmem>>, vector<1x256xi32>,
    %c0_i32_15 = arith.constant 0 : i32
    %21 = arith.cmpi eq, %arg1, %c0_i32_15 : i32
    %22 = arith.extui %21 : i1 to i32
    %c0_i32_16 = arith.constant 0 : i32
    %23 = arith.cmpi ne, %22, %c0_i32_16 : i32
    scf.if %23 {
      %c0_17 = arith.constant 0 : index
      %c0_18 = arith.constant 0 : index
      %24 = vector.load %arg6[%c0_17, %c0_18] : memref<1x256xi32, #tpu.memory_space<vmem>>, vector<1x256xi32>
      %25 = vector.shape_cast %24 : vector<1x256xi32> to vector<1x1x256xi32>
      %c0_19 = arith.constant 0 : index
      %c0_20 = arith.constant 0 : index
      %c0_21 = arith.constant 0 : index
      %26 = vector.load %arg4[%c0_19, %c0_20, %c0_21] : memref<1x1x256xi32, #tpu.memory_space<vmem>>, vector<1x1x256xi32>
      tpu.vector_store %arg4[%c0_19, %c0_20, %c0_21], %25 {strides = array<i32>} : memref<1x1x256xi32, #tpu.memory_space<vmem>>, vector<1x1x256xi32>,
    } else {
    }
    return
  }
  func.func @transform_0(%arg0: i32, %arg1: i32) -> (i32, i32) {
    %c0_i32 = arith.constant 0 : i32
    %c0_i32_0 = arith.constant 0 : i32
    return %arg0, %c0_i32 : i32, i32
  }
  func.func @transform_1(%arg0: i32, %arg1: i32) -> (i32, i32) {
    %c0_i32 = arith.constant 0 : i32
    %c0_i32_0 = arith.constant 0 : i32
    return %c0_i32, %arg1 : i32, i32
  }
  func.func @transform_2(%arg0: i32, %arg1: i32) -> (i32, i32, i32) {
    %c0_i32 = arith.constant 0 : i32
    %c0_i32_0 = arith.constant 0 : i32
    %c0_i32_1 = arith.constant 0 : i32
    return %arg0, %c0_i32, %c0_i32_0 : i32, i32, i32
  }
}

</mosaic_0001>

<llo_original>
// kernel: quantizer_forward.1
$region0: #{quantizer_forward.1}
  #allocation0 [shape = 'u32[]', space=smem, size = 0x4, offset = 0x4, fixed_abs, tag = 'smem constant byte address 0x4 - core index']
  #allocation1 [shape = 'u32[72,128]{1,0:T(1,128)}', space=vmem, size = 0x9000, scoped, tag = 'internal scratch']
  #allocation2 [shape = 'f32[1,256]{1,0:T(1,128)}', space=vmem, size = 0x400, scoped, tag = 'scratch operand']
  #allocation3 [shape = 's32[1,256]{1,0:T(1,128)}', space=vmem, size = 0x400, scoped, tag = 'scratch operand']
  %s0 = inlined_call_operand.vmem [shape: f32[256,33], index: 0, kind: input, shape index: {}]
  %s1 = inlined_call_operand.vmem [shape: f32[33,64], index: 1, kind: input, shape index: {}]
  %s2 = inlined_call_operand.vmem [shape: s32[1,1,256], index: 2, kind: output, shape index: {}]
  %s3 = sld [smem:[#allocation0]]
  $region26: #{quantizer_forward.1} parent=0
    _
  %s5 = ssub.s32 1, %s3
  %s6 = scalar_select 0, %s5, %s3
  // Predicated region
  $region2: #{quantizer_forward.1} parent=0 // pred_check
    _
  $region3: #{quantizer_forward.1} parent=0 // pred_check_branch
    %8 = sbr.rel (0) target = $region5
  $region4: #{quantizer_forward.1} parent=0 // pred_region
    _
  $region5: #{quantizer_forward.1} parent=0 // pred_fallthru
    _
  // Predicated region
  $region6: #{quantizer_forward.1} parent=0 // pred_check
    _
  $region7: #{quantizer_forward.1} parent=0 // pred_check_branch
    %10 = sbr.rel (0) target = $region9
  $region8: #{quantizer_forward.1} parent=0 // pred_region
    _
  $region9: #{quantizer_forward.1} parent=0 // pred_fallthru
    _
  %p11 = scmp.eq.s32.totalorder 0, 0
  // Predicated region
  $region10: #{quantizer_forward.1} parent=0 // pred_check
    %p12 = pneg %p11
  $region11: #{quantizer_forward.1} parent=0 // pred_check_branch
    %14 = sbr.rel (%p12) target = $region13
  $region12: #{quantizer_forward.1} parent=0 // pred_region
    %v15 = vlaneseq
    %vm16 = vcmp.ge.s32.totalorder %v15, 0
    %vm17 = vcmp.lt.s32.totalorder %v15, 256
    %vm18 = vmand %vm16, %vm17
    %19 = vst.msk [vmem:[#allocation2] sm:$0x3] %vm18, -inf
    %20 = vst.msk [vmem:[#allocation3] sm:$0x3] %vm18, 0
  $region13: #{quantizer_forward.1} parent=0 // pred_fallthru
    _
  %v21 = vld [vmem:[%s0] sm:$0xff]
  %v22 = vld [vmem:[%s0 + $0x8] sm:$0xff]
  %v23 = vld [vmem:[%s0 + $0x10] sm:$0xff]
  %v24 = vld [vmem:[%s0 + $0x18] sm:$0xff]
  %v25 = vld [vmem:[%s0 + $0x20] sm:$0xff]
  %v26 = vld [vmem:[%s0 + $0x28] sm:$0xff]
  %v27 = vld [vmem:[%s0 + $0x30] sm:$0xff]
  %v28 = vld [vmem:[%s0 + $0x38] sm:$0xff]
  %v29 = vld [vmem:[%s0 + $0x40] sm:$0xff]
  %v30 = vld [vmem:[%s0 + $0x48] sm:$0xff]
  %v31 = vld [vmem:[%s0 + $0x50] sm:$0xff]
  %v32 = vld [vmem:[%s0 + $0x58] sm:$0xff]
  %v33 = vld [vmem:[%s0 + $0x60] sm:$0xff]
  %v34 = vld [vmem:[%s0 + $0x68] sm:$0xff]
  %v35 = vld [vmem:[%s0 + $0x70] sm:$0xff]
  %v36 = vld [vmem:[%s0 + $0x78] sm:$0xff]
  %v37 = vld [vmem:[%s0 + $0x80] sm:$0xff]
  %v38 = vld [vmem:[%s0 + $0x88] sm:$0xff]
  %v39 = vld [vmem:[%s0 + $0x90] sm:$0xff]
  %v40 = vld [vmem:[%s0 + $0x98] sm:$0xff]
  %v41 = vld [vmem:[%s0 + $0xa0] sm:$0xff]
  %v42 = vld [vmem:[%s0 + $0xa8] sm:$0xff]
  %v43 = vld [vmem:[%s0 + $0xb0] sm:$0xff]
  %v44 = vld [vmem:[%s0 + $0xb8] sm:$0xff]
  %v45 = vld [vmem:[%s0 + $0xc0] sm:$0xff]
  %v46 = vld [vmem:[%s0 + $0xc8] sm:$0xff]
  %v47 = vld [vmem:[%s0 + $0xd0] sm:$0xff]
  %v48 = vld [vmem:[%s0 + $0xd8] sm:$0xff]
  %v49 = vld [vmem:[%s0 + $0xe0] sm:$0xff]
  %v50 = vld [vmem:[%s0 + $0xe8] sm:$0xff]
  %v51 = vld [vmem:[%s0 + $0xf0] sm:$0xff]
  %v52 = vld [vmem:[%s0 + $0xf8] sm:$0xff]
  %v53 = vld [vmem:[%s1] sm:$0xff]
  %v54 = vld [vmem:[%s1 + $0x8] sm:$0xff]
  %v55 = vld [vmem:[%s1 + $0x10] sm:$0xff]
  %v56 = vld [vmem:[%s1 + $0x18] sm:$0xff]
  %v57 = vld [vmem:[%s1 + $0x20] sm:$0x1]
  %vm58 = vcmask 269312
  %v60 = vsel %vm58, %v21, 0
  %v63 = vsel %vm58, %v22, 0
  %v66 = vsel %vm58, %v23, 0
  %v69 = vsel %vm58, %v24, 0
  %v72 = vsel %vm58, %v25, 0
  %v75 = vsel %vm58, %v26, 0
  %v78 = vsel %vm58, %v27, 0
  %v81 = vsel %vm58, %v28, 0
  %v84 = vsel %vm58, %v29, 0
  %v87 = vsel %vm58, %v30, 0
  %v90 = vsel %vm58, %v31, 0
  %v93 = vsel %vm58, %v32, 0
  %v96 = vsel %vm58, %v33, 0
  %v99 = vsel %vm58, %v34, 0
  %v102 = vsel %vm58, %v35, 0
  %v105 = vsel %vm58, %v36, 0
  %v108 = vsel %vm58, %v37, 0
  %v111 = vsel %vm58, %v38, 0
  %v114 = vsel %vm58, %v39, 0
  %v117 = vsel %vm58, %v40, 0
  %v120 = vsel %vm58, %v41, 0
  %v123 = vsel %vm58, %v42, 0
  %v126 = vsel %vm58, %v43, 0
  %v129 = vsel %vm58, %v44, 0
  %v132 = vsel %vm58, %v45, 0
  %v135 = vsel %vm58, %v46, 0
  %v138 = vsel %vm58, %v47, 0
  %v141 = vsel %vm58, %v48, 0
  %v144 = vsel %vm58, %v49, 0
  %v147 = vsel %vm58, %v50, 0
  %v150 = vsel %vm58, %v51, 0
  %v153 = vsel %vm58, %v52, 0
  %vm155 = vcmask 1040384
  %v157 = vsel %vm155, %v57, 0
  %159 = vmatpush.msra.mxu0 0.0
  %160 = vmatpush.msra.mxu0 0.0
  %161 = vmatpush.msra.mxu0 0.0
  %162 = vmatpush.msra.mxu0 0.0
  %163 = vmatpush.msra.mxu0 0.0
  %164 = vmatpush.msra.mxu0 0.0
  %165 = vmatpush.msra.mxu0 0.0
  %166 = vmatpush.msra.mxu0 0.0
  %167 = vmatpush.msra.mxu0 0.0
  %168 = vmatpush.msra.mxu0 0.0
  %169 = vmatpush.msra.mxu0 0.0
  %170 = vmatpush.msra.mxu0 %v157
  %171 = vmatpush.msra.mxu0 %v56
  %172 = vmatpush.msra.mxu0 %v55
  %173 = vmatpush.msra.mxu0 %v54
  %174 = vmatpush.msra.mxu0 %v53
  %175 = vmatmul.f32.gmra.mxu0 %v60
  %v176 = vpop.f32.mrf.mxu0
  %v177 = vadd.f32 0.0, %v176
  %178 = vmatmul.f32.gmra.mxu0 %v63
  %v179 = vpop.f32.mrf.mxu0
  %v180 = vadd.f32 0.0, %v179
  %181 = vmatmul.f32.gmra.mxu0 %v66
  %v182 = vpop.f32.mrf.mxu0
  %v183 = vadd.f32 0.0, %v182
  %184 = vmatmul.f32.gmra.mxu0 %v69
  %v185 = vpop.f32.mrf.mxu0
  %v186 = vadd.f32 0.0, %v185
  %187 = vmatmul.f32.gmra.mxu0 %v72
  %v188 = vpop.f32.mrf.mxu0
  %v189 = vadd.f32 0.0, %v188
  %190 = vmatmul.f32.gmra.mxu0 %v75
  %v191 = vpop.f32.mrf.mxu0
  %v192 = vadd.f32 0.0, %v191
  %193 = vmatmul.f32.gmra.mxu0 %v78
  %v194 = vpop.f32.mrf.mxu0
  %v195 = vadd.f32 0.0, %v194
  %196 = vmatmul.f32.gmra.mxu0 %v81
  %v197 = vpop.f32.mrf.mxu0
  %v198 = vadd.f32 0.0, %v197
  %199 = vmatmul.f32.gmra.mxu0 %v84
  %v200 = vpop.f32.mrf.mxu0
  %v201 = vadd.f32 0.0, %v200
  %202 = vmatmul.f32.gmra.mxu0 %v87
  %v203 = vpop.f32.mrf.mxu0
  %v204 = vadd.f32 0.0, %v203
  %205 = vmatmul.f32.gmra.mxu0 %v90
  %v206 = vpop.f32.mrf.mxu0
  %v207 = vadd.f32 0.0, %v206
  %208 = vmatmul.f32.gmra.mxu0 %v93
  %v209 = vpop.f32.mrf.mxu0
  %v210 = vadd.f32 0.0, %v209
  %211 = vmatmul.f32.gmra.mxu0 %v96
  %v212 = vpop.f32.mrf.mxu0
  %v213 = vadd.f32 0.0, %v212
  %214 = vmatmul.f32.gmra.mxu0 %v99
  %v215 = vpop.f32.mrf.mxu0
  %v216 = vadd.f32 0.0, %v215
  %217 = vmatmul.f32.gmra.mxu0 %v102
  %v218 = vpop.f32.mrf.mxu0
  %v219 = vadd.f32 0.0, %v218
  %220 = vmatmul.f32.gmra.mxu0 %v105
  %v221 = vpop.f32.mrf.mxu0
  %v222 = vadd.f32 0.0, %v221
  %223 = vmatmul.f32.gmra.mxu0 %v108
  %v224 = vpop.f32.mrf.mxu0
  %v225 = vadd.f32 0.0, %v224
  %226 = vmatmul.f32.gmra.mxu0 %v111
  %v227 = vpop.f32.mrf.mxu0
  %v228 = vadd.f32 0.0, %v227
  %229 = vmatmul.f32.gmra.mxu0 %v114
  %v230 = vpop.f32.mrf.mxu0
  %v231 = vadd.f32 0.0, %v230
  %232 = vmatmul.f32.gmra.mxu0 %v117
  %v233 = vpop.f32.mrf.mxu0
  %v234 = vadd.f32 0.0, %v233
  %235 = vmatmul.f32.gmra.mxu0 %v120
  %v236 = vpop.f32.mrf.mxu0
  %v237 = vadd.f32 0.0, %v236
  %238 = vmatmul.f32.gmra.mxu0 %v123
  %v239 = vpop.f32.mrf.mxu0
  %v240 = vadd.f32 0.0, %v239
  %241 = vmatmul.f32.gmra.mxu0 %v126
  %v242 = vpop.f32.mrf.mxu0
  %v243 = vadd.f32 0.0, %v242
  %244 = vmatmul.f32.gmra.mxu0 %v129
  %v245 = vpop.f32.mrf.mxu0
  %v246 = vadd.f32 0.0, %v245
  %247 = vmatmul.f32.gmra.mxu0 %v132
  %v248 = vpop.f32.mrf.mxu0
  %v249 = vadd.f32 0.0, %v248
  %250 = vmatmul.f32.gmra.mxu0 %v135
  %v251 = vpop.f32.mrf.mxu0
  %v252 = vadd.f32 0.0, %v251
  %253 = vmatmul.f32.gmra.mxu0 %v138
  %v254 = vpop.f32.mrf.mxu0
  %v255 = vadd.f32 0.0, %v254
  %256 = vmatmul.f32.gmra.mxu0 %v141
  %v257 = vpop.f32.mrf.mxu0
  %v258 = vadd.f32 0.0, %v257
  %259 = vmatmul.f32.gmra.mxu0 %v144
  %v260 = vpop.f32.mrf.mxu0
  %v261 = vadd.f32 0.0, %v260
  %262 = vmatmul.f32.gmra.mxu0 %v147
  %v263 = vpop.f32.mrf.mxu0
  %v264 = vadd.f32 0.0, %v263
  %265 = vmatmul.f32.gmra.mxu0 %v150
  %v266 = vpop.f32.mrf.mxu0
  %v267 = vadd.f32 0.0, %v266
  %268 = vmatmul.f32.gmra.mxu0 %v153
  %v269 = vpop.f32.mrf.mxu0
  %v270 = vadd.f32 0.0, %v269
  %271 = vdwg.mxu0
  %vm272 = vcmask 523264
  %v273 = vsel %vm272, %v177, -inf
  %274 = vmax.xlane.f32.xlu0 %v273
  %v275 = vpop.xlane.xlu0 %274
  %v276 = vsel %vm272, %v180, -inf
  %277 = vmax.xlane.f32.xlu0 %v276
  %v278 = vpop.xlane.xlu0 %277
  %v279 = vsel %vm272, %v183, -inf
  %280 = vmax.xlane.f32.xlu0 %v279
  %v281 = vpop.xlane.xlu0 %280
  %v282 = vsel %vm272, %v186, -inf
  %283 = vmax.xlane.f32.xlu0 %v282
  %v284 = vpop.xlane.xlu0 %283
  %v285 = vsel %vm272, %v189, -inf
  %286 = vmax.xlane.f32.xlu0 %v285
  %v287 = vpop.xlane.xlu0 %286
  %v288 = vsel %vm272, %v192, -inf
  %289 = vmax.xlane.f32.xlu0 %v288
  %v290 = vpop.xlane.xlu0 %289
  %v291 = vsel %vm272, %v195, -inf
  %292 = vmax.xlane.f32.xlu0 %v291
  %v293 = vpop.xlane.xlu0 %292
  %v294 = vsel %vm272, %v198, -inf
  %295 = vmax.xlane.f32.xlu0 %v294
  %v296 = vpop.xlane.xlu0 %295
  %v297 = vsel %vm272, %v201, -inf
  %298 = vmax.xlane.f32.xlu0 %v297
  %v299 = vpop.xlane.xlu0 %298
  %v300 = vsel %vm272, %v204, -inf
  %301 = vmax.xlane.f32.xlu0 %v300
  %v302 = vpop.xlane.xlu0 %301
  %v303 = vsel %vm272, %v207, -inf
  %304 = vmax.xlane.f32.xlu0 %v303
  %v305 = vpop.xlane.xlu0 %304
  %v306 = vsel %vm272, %v210, -inf
  %307 = vmax.xlane.f32.xlu0 %v306
  %v308 = vpop.xlane.xlu0 %307
  %v309 = vsel %vm272, %v213, -inf
  %310 = vmax.xlane.f32.xlu0 %v309
  %v311 = vpop.xlane.xlu0 %310
  %v312 = vsel %vm272, %v216, -inf
  %313 = vmax.xlane.f32.xlu0 %v312
  %v314 = vpop.xlane.xlu0 %313
  %v315 = vsel %vm272, %v219, -inf
  %316 = vmax.xlane.f32.xlu0 %v315
  %v317 = vpop.xlane.xlu0 %316
  %v318 = vsel %vm272, %v222, -inf
  %319 = vmax.xlane.f32.xlu0 %v318
  %v320 = vpop.xlane.xlu0 %319
  %v321 = vsel %vm272, %v225, -inf
  %322 = vmax.xlane.f32.xlu0 %v321
  %v323 = vpop.xlane.xlu0 %322
  %v324 = vsel %vm272, %v228, -inf
  %325 = vmax.xlane.f32.xlu0 %v324
  %v326 = vpop.xlane.xlu0 %325
  %v327 = vsel %vm272, %v231, -inf
  %328 = vmax.xlane.f32.xlu0 %v327
  %v329 = vpop.xlane.xlu0 %328
  %v330 = vsel %vm272, %v234, -inf
  %331 = vmax.xlane.f32.xlu0 %v330
  %v332 = vpop.xlane.xlu0 %331
  %v333 = vsel %vm272, %v237, -inf
  %334 = vmax.xlane.f32.xlu0 %v333
  %v335 = vpop.xlane.xlu0 %334
  %v336 = vsel %vm272, %v240, -inf
  %337 = vmax.xlane.f32.xlu0 %v336
  %v338 = vpop.xlane.xlu0 %337
  %v339 = vsel %vm272, %v243, -inf
  %340 = vmax.xlane.f32.xlu0 %v339
  %v341 = vpop.xlane.xlu0 %340
  %v342 = vsel %vm272, %v246, -inf
  %343 = vmax.xlane.f32.xlu0 %v342
  %v344 = vpop.xlane.xlu0 %343
  %v345 = vsel %vm272, %v249, -inf
  %346 = vmax.xlane.f32.xlu0 %v345
  %v347 = vpop.xlane.xlu0 %346
  %v348 = vsel %vm272, %v252, -inf
  %349 = vmax.xlane.f32.xlu0 %v348
  %v350 = vpop.xlane.xlu0 %349
  %v351 = vsel %vm272, %v255, -inf
  %352 = vmax.xlane.f32.xlu0 %v351
  %v353 = vpop.xlane.xlu0 %352
  %v354 = vsel %vm272, %v258, -inf
  %355 = vmax.xlane.f32.xlu0 %v354
  %v356 = vpop.xlane.xlu0 %355
  %v357 = vsel %vm272, %v261, -inf
  %358 = vmax.xlane.f32.xlu0 %v357
  %v359 = vpop.xlane.xlu0 %358
  %v360 = vsel %vm272, %v264, -inf
  %361 = vmax.xlane.f32.xlu0 %v360
  %v362 = vpop.xlane.xlu0 %361
  %v363 = vsel %vm272, %v267, -inf
  %364 = vmax.xlane.f32.xlu0 %v363
  %v365 = vpop.xlane.xlu0 %364
  %v366 = vsel %vm272, %v270, -inf
  %367 = vmax.xlane.f32.xlu0 %v366
  %v368 = vpop.xlane.xlu0 %367
  %369 = vmax.index.xlane.f32.xlu0 %v273
  %v370 = vpop.xlane.xlu0 %369
  %371 = vmax.index.xlane.f32.xlu0 %v276
  %v372 = vpop.xlane.xlu0 %371
  %373 = vmax.index.xlane.f32.xlu0 %v279
  %v374 = vpop.xlane.xlu0 %373
  %375 = vmax.index.xlane.f32.xlu0 %v282
  %v376 = vpop.xlane.xlu0 %375
  %377 = vmax.index.xlane.f32.xlu0 %v285
  %v378 = vpop.xlane.xlu0 %377
  %379 = vmax.index.xlane.f32.xlu0 %v288
  %v380 = vpop.xlane.xlu0 %379
  %381 = vmax.index.xlane.f32.xlu0 %v291
  %v382 = vpop.xlane.xlu0 %381
  %383 = vmax.index.xlane.f32.xlu0 %v294
  %v384 = vpop.xlane.xlu0 %383
  %385 = vmax.index.xlane.f32.xlu0 %v297
  %v386 = vpop.xlane.xlu0 %385
  %387 = vmax.index.xlane.f32.xlu0 %v300
  %v388 = vpop.xlane.xlu0 %387
  %389 = vmax.index.xlane.f32.xlu0 %v303
  %v390 = vpop.xlane.xlu0 %389
  %391 = vmax.index.xlane.f32.xlu0 %v306
  %v392 = vpop.xlane.xlu0 %391
  %393 = vmax.index.xlane.f32.xlu0 %v309
  %v394 = vpop.xlane.xlu0 %393
  %395 = vmax.index.xlane.f32.xlu0 %v312
  %v396 = vpop.xlane.xlu0 %395
  %397 = vmax.index.xlane.f32.xlu0 %v315
  %v398 = vpop.xlane.xlu0 %397
  %399 = vmax.index.xlane.f32.xlu0 %v318
  %v400 = vpop.xlane.xlu0 %399
  %401 = vmax.index.xlane.f32.xlu0 %v321
  %v402 = vpop.xlane.xlu0 %401
  %403 = vmax.index.xlane.f32.xlu0 %v324
  %v404 = vpop.xlane.xlu0 %403
  %405 = vmax.index.xlane.f32.xlu0 %v327
  %v406 = vpop.xlane.xlu0 %405
  %407 = vmax.index.xlane.f32.xlu0 %v330
  %v408 = vpop.xlane.xlu0 %407
  %409 = vmax.index.xlane.f32.xlu0 %v333
  %v410 = vpop.xlane.xlu0 %409
  %411 = vmax.index.xlane.f32.xlu0 %v336
  %v412 = vpop.xlane.xlu0 %411
  %413 = vmax.index.xlane.f32.xlu0 %v339
  %v414 = vpop.xlane.xlu0 %413
  %415 = vmax.index.xlane.f32.xlu0 %v342
  %v416 = vpop.xlane.xlu0 %415
  %417 = vmax.index.xlane.f32.xlu0 %v345
  %v418 = vpop.xlane.xlu0 %417
  %419 = vmax.index.xlane.f32.xlu0 %v348
  %v420 = vpop.xlane.xlu0 %419
  %421 = vmax.index.xlane.f32.xlu0 %v351
  %v422 = vpop.xlane.xlu0 %421
  %423 = vmax.index.xlane.f32.xlu0 %v354
  %v424 = vpop.xlane.xlu0 %423
  %425 = vmax.index.xlane.f32.xlu0 %v357
  %v426 = vpop.xlane.xlu0 %425
  %427 = vmax.index.xlane.f32.xlu0 %v360
  %v428 = vpop.xlane.xlu0 %427
  %429 = vmax.index.xlane.f32.xlu0 %v363
  %v430 = vpop.xlane.xlu0 %429
  %431 = vmax.index.xlane.f32.xlu0 %v366
  %v432 = vpop.xlane.xlu0 %431
  %s433 = smul.u32 0, 64
  %v434 = vstv %s433
  %v435 = vadd.s32 %v370, %v434
  %v436 = vadd.s32 %v372, %v434
  %v437 = vadd.s32 %v374, %v434
  %v438 = vadd.s32 %v376, %v434
  %v439 = vadd.s32 %v378, %v434
  %v440 = vadd.s32 %v380, %v434
  %v441 = vadd.s32 %v382, %v434
  %v442 = vadd.s32 %v384, %v434
  %v443 = vadd.s32 %v386, %v434
  %v444 = vadd.s32 %v388, %v434
  %v445 = vadd.s32 %v390, %v434
  %v446 = vadd.s32 %v392, %v434
  %v447 = vadd.s32 %v394, %v434
  %v448 = vadd.s32 %v396, %v434
  %v449 = vadd.s32 %v398, %v434
  %v450 = vadd.s32 %v400, %v434
  %v451 = vadd.s32 %v402, %v434
  %v452 = vadd.s32 %v404, %v434
  %v453 = vadd.s32 %v406, %v434
  %v454 = vadd.s32 %v408, %v434
  %v455 = vadd.s32 %v410, %v434
  %v456 = vadd.s32 %v412, %v434
  %v457 = vadd.s32 %v414, %v434
  %v458 = vadd.s32 %v416, %v434
  %v459 = vadd.s32 %v418, %v434
  %v460 = vadd.s32 %v420, %v434
  %v461 = vadd.s32 %v422, %v434
  %v462 = vadd.s32 %v424, %v434
  %v463 = vadd.s32 %v426, %v434
  %v464 = vadd.s32 %v428, %v434
  %v465 = vadd.s32 %v430, %v434
  %v466 = vadd.s32 %v432, %v434
  %v467 = vld [vmem:[#allocation2] sm:$0x3]
  %v469 = vperm.slane %v467, 0
  %v470 = vperm.slane %v467, 1
  %v471 = vlaneseq
  %v472 = vshrl.u32 %v471, 7
  %474 = vset.pattern.permute.xlu0 %v472
  %475 = vperm.xlu0 %474, %v469
  %v476 = vpop.permute.xlu0 %475
  %v477 = vlaneseq
  %v478 = vshrl.u32 %v477, 7
  %v479 = vadd.s32 %v478, 8
  %480 = vset.pattern.permute.xlu0 %v479
  %481 = vperm.xlu0 %480, %v469
  %v482 = vpop.permute.xlu0 %481
  %v483 = vlaneseq
  %v484 = vshrl.u32 %v483, 7
  %v485 = vadd.s32 %v484, 16
  %486 = vset.pattern.permute.xlu0 %v485
  %487 = vperm.xlu0 %486, %v469
  %v488 = vpop.permute.xlu0 %487
  %v489 = vlaneseq
  %v490 = vshrl.u32 %v489, 7
  %v491 = vadd.s32 %v490, 24
  %492 = vset.pattern.permute.xlu0 %v491
  %493 = vperm.xlu0 %492, %v469
  %v494 = vpop.permute.xlu0 %493
  %v495 = vlaneseq
  %v496 = vshrl.u32 %v495, 7
  %v497 = vadd.s32 %v496, 32
  %498 = vset.pattern.permute.xlu0 %v497
  %499 = vperm.xlu0 %498, %v469
  %v500 = vpop.permute.xlu0 %499
  %v501 = vlaneseq
  %v502 = vshrl.u32 %v501, 7
  %v503 = vadd.s32 %v502, 40
  %504 = vset.pattern.permute.xlu0 %v503
  %505 = vperm.xlu0 %504, %v469
  %v506 = vpop.permute.xlu0 %505
  %v507 = vlaneseq
  %v508 = vshrl.u32 %v507, 7
  %v509 = vadd.s32 %v508, 48
  %510 = vset.pattern.permute.xlu0 %v509
  %511 = vperm.xlu0 %510, %v469
  %v512 = vpop.permute.xlu0 %511
  %v513 = vlaneseq
  %v514 = vshrl.u32 %v513, 7
  %v515 = vadd.s32 %v514, 56
  %516 = vset.pattern.permute.xlu0 %v515
  %517 = vperm.xlu0 %516, %v469
  %v518 = vpop.permute.xlu0 %517
  %v519 = vlaneseq
  %v520 = vshrl.u32 %v519, 7
  %v521 = vadd.s32 %v520, 64
  %522 = vset.pattern.permute.xlu0 %v521
  %523 = vperm.xlu0 %522, %v469
  %v524 = vpop.permute.xlu0 %523
  %v525 = vlaneseq
  %v526 = vshrl.u32 %v525, 7
  %v527 = vadd.s32 %v526, 72
  %528 = vset.pattern.permute.xlu0 %v527
  %529 = vperm.xlu0 %528, %v469
  %v530 = vpop.permute.xlu0 %529
  %v531 = vlaneseq
  %v532 = vshrl.u32 %v531, 7
  %v533 = vadd.s32 %v532, 80
  %534 = vset.pattern.permute.xlu0 %v533
  %535 = vperm.xlu0 %534, %v469
  %v536 = vpop.permute.xlu0 %535
  %v537 = vlaneseq
  %v538 = vshrl.u32 %v537, 7
  %v539 = vadd.s32 %v538, 88
  %540 = vset.pattern.permute.xlu0 %v539
  %541 = vperm.xlu0 %540, %v469
  %v542 = vpop.permute.xlu0 %541
  %v543 = vlaneseq
  %v544 = vshrl.u32 %v543, 7
  %v545 = vadd.s32 %v544, 96
  %546 = vset.pattern.permute.xlu0 %v545
  %547 = vperm.xlu0 %546, %v469
  %v548 = vpop.permute.xlu0 %547
  %v549 = vlaneseq
  %v550 = vshrl.u32 %v549, 7
  %v551 = vadd.s32 %v550, 104
  %552 = vset.pattern.permute.xlu0 %v551
  %553 = vperm.xlu0 %552, %v469
  %v554 = vpop.permute.xlu0 %553
  %v555 = vlaneseq
  %v556 = vshrl.u32 %v555, 7
  %v557 = vadd.s32 %v556, 112
  %558 = vset.pattern.permute.xlu0 %v557
  %559 = vperm.xlu0 %558, %v469
  %v560 = vpop.permute.xlu0 %559
  %v561 = vlaneseq
  %v562 = vshrl.u32 %v561, 7
  %v563 = vadd.s32 %v562, 120
  %564 = vset.pattern.permute.xlu0 %v563
  %565 = vperm.xlu0 %564, %v469
  %v566 = vpop.permute.xlu0 %565
  %v567 = vlaneseq
  %v568 = vshrl.u32 %v567, 7
  %570 = vset.pattern.permute.xlu0 %v568
  %571 = vperm.xlu0 %570, %v470
  %v572 = vpop.permute.xlu0 %571
  %v573 = vlaneseq
  %v574 = vshrl.u32 %v573, 7
  %v575 = vadd.s32 %v574, 8
  %576 = vset.pattern.permute.xlu0 %v575
  %577 = vperm.xlu0 %576, %v470
  %v578 = vpop.permute.xlu0 %577
  %v579 = vlaneseq
  %v580 = vshrl.u32 %v579, 7
  %v581 = vadd.s32 %v580, 16
  %582 = vset.pattern.permute.xlu0 %v581
  %583 = vperm.xlu0 %582, %v470
  %v584 = vpop.permute.xlu0 %583
  %v585 = vlaneseq
  %v586 = vshrl.u32 %v585, 7
  %v587 = vadd.s32 %v586, 24
  %588 = vset.pattern.permute.xlu0 %v587
  %589 = vperm.xlu0 %588, %v470
  %v590 = vpop.permute.xlu0 %589
  %v591 = vlaneseq
  %v592 = vshrl.u32 %v591, 7
  %v593 = vadd.s32 %v592, 32
  %594 = vset.pattern.permute.xlu0 %v593
  %595 = vperm.xlu0 %594, %v470
  %v596 = vpop.permute.xlu0 %595
  %v597 = vlaneseq
  %v598 = vshrl.u32 %v597, 7
  %v599 = vadd.s32 %v598, 40
  %600 = vset.pattern.permute.xlu0 %v599
  %601 = vperm.xlu0 %600, %v470
  %v602 = vpop.permute.xlu0 %601
  %v603 = vlaneseq
  %v604 = vshrl.u32 %v603, 7
  %v605 = vadd.s32 %v604, 48
  %606 = vset.pattern.permute.xlu0 %v605
  %607 = vperm.xlu0 %606, %v470
  %v608 = vpop.permute.xlu0 %607
  %v609 = vlaneseq
  %v610 = vshrl.u32 %v609, 7
  %v611 = vadd.s32 %v610, 56
  %612 = vset.pattern.permute.xlu0 %v611
  %613 = vperm.xlu0 %612, %v470
  %v614 = vpop.permute.xlu0 %613
  %v615 = vlaneseq
  %v616 = vshrl.u32 %v615, 7
  %v617 = vadd.s32 %v616, 64
  %618 = vset.pattern.permute.xlu0 %v617
  %619 = vperm.xlu0 %618, %v470
  %v620 = vpop.permute.xlu0 %619
  %v621 = vlaneseq
  %v622 = vshrl.u32 %v621, 7
  %v623 = vadd.s32 %v622, 72
  %624 = vset.pattern.permute.xlu0 %v623
  %625 = vperm.xlu0 %624, %v470
  %v626 = vpop.permute.xlu0 %625
  %v627 = vlaneseq
  %v628 = vshrl.u32 %v627, 7
  %v629 = vadd.s32 %v628, 80
  %630 = vset.pattern.permute.xlu0 %v629
  %631 = vperm.xlu0 %630, %v470
  %v632 = vpop.permute.xlu0 %631
  %v633 = vlaneseq
  %v634 = vshrl.u32 %v633, 7
  %v635 = vadd.s32 %v634, 88
  %636 = vset.pattern.permute.xlu0 %v635
  %637 = vperm.xlu0 %636, %v470
  %v638 = vpop.permute.xlu0 %637
  %v639 = vlaneseq
  %v640 = vshrl.u32 %v639, 7
  %v641 = vadd.s32 %v640, 96
  %642 = vset.pattern.permute.xlu0 %v641
  %643 = vperm.xlu0 %642, %v470
  %v644 = vpop.permute.xlu0 %643
  %v645 = vlaneseq
  %v646 = vshrl.u32 %v645, 7
  %v647 = vadd.s32 %v646, 104
  %648 = vset.pattern.permute.xlu0 %v647
  %649 = vperm.xlu0 %648, %v470
  %v650 = vpop.permute.xlu0 %649
  %v651 = vlaneseq
  %v652 = vshrl.u32 %v651, 7
  %v653 = vadd.s32 %v652, 112
  %654 = vset.pattern.permute.xlu0 %v653
  %655 = vperm.xlu0 %654, %v470
  %v656 = vpop.permute.xlu0 %655
  %v657 = vlaneseq
  %v658 = vshrl.u32 %v657, 7
  %v659 = vadd.s32 %v658, 120
  %660 = vset.pattern.permute.xlu0 %v659
  %661 = vperm.xlu0 %660, %v470
  %v662 = vpop.permute.xlu0 %661
  %vm695 = vcmp.gt.f32.partialorder %v275, %v476
  %vm696 = vcmp.gt.f32.partialorder %v278, %v482
  %vm697 = vcmp.gt.f32.partialorder %v281, %v488
  %vm698 = vcmp.gt.f32.partialorder %v284, %v494
  %vm699 = vcmp.gt.f32.partialorder %v287, %v500
  %vm700 = vcmp.gt.f32.partialorder %v290, %v506
  %vm701 = vcmp.gt.f32.partialorder %v293, %v512
  %vm702 = vcmp.gt.f32.partialorder %v296, %v518
  %vm703 = vcmp.gt.f32.partialorder %v299, %v524
  %vm704 = vcmp.gt.f32.partialorder %v302, %v530
  %vm705 = vcmp.gt.f32.partialorder %v305, %v536
  %vm706 = vcmp.gt.f32.partialorder %v308, %v542
  %vm707 = vcmp.gt.f32.partialorder %v311, %v548
  %vm708 = vcmp.gt.f32.partialorder %v314, %v554
  %vm709 = vcmp.gt.f32.partialorder %v317, %v560
  %vm710 = vcmp.gt.f32.partialorder %v320, %v566
  %vm711 = vcmp.gt.f32.partialorder %v323, %v572
  %vm712 = vcmp.gt.f32.partialorder %v326, %v578
  %vm713 = vcmp.gt.f32.partialorder %v329, %v584
  %vm714 = vcmp.gt.f32.partialorder %v332, %v590
  %vm715 = vcmp.gt.f32.partialorder %v335, %v596
  %vm716 = vcmp.gt.f32.partialorder %v338, %v602
  %vm717 = vcmp.gt.f32.partialorder %v341, %v608
  %vm718 = vcmp.gt.f32.partialorder %v344, %v614
  %vm719 = vcmp.gt.f32.partialorder %v347, %v620
  %vm720 = vcmp.gt.f32.partialorder %v350, %v626
  %vm721 = vcmp.gt.f32.partialorder %v353, %v632
  %vm722 = vcmp.gt.f32.partialorder %v356, %v638
  %vm723 = vcmp.gt.f32.partialorder %v359, %v644
  %vm724 = vcmp.gt.f32.partialorder %v362, %v650
  %vm725 = vcmp.gt.f32.partialorder %v365, %v656
  %vm726 = vcmp.gt.f32.partialorder %v368, %v662
  %v727 = vsel %vm695, %v275, %v476
  %v728 = vsel %vm696, %v278, %v482
  %v729 = vsel %vm697, %v281, %v488
  %v730 = vsel %vm698, %v284, %v494
  %v731 = vsel %vm699, %v287, %v500
  %v732 = vsel %vm700, %v290, %v506
  %v733 = vsel %vm701, %v293, %v512
  %v734 = vsel %vm702, %v296, %v518
  %v735 = vsel %vm703, %v299, %v524
  %v736 = vsel %vm704, %v302, %v530
  %v737 = vsel %vm705, %v305, %v536
  %v738 = vsel %vm706, %v308, %v542
  %v739 = vsel %vm707, %v311, %v548
  %v740 = vsel %vm708, %v314, %v554
  %v741 = vsel %vm709, %v317, %v560
  %v742 = vsel %vm710, %v320, %v566
  %v743 = vsel %vm711, %v323, %v572
  %v744 = vsel %vm712, %v326, %v578
  %v745 = vsel %vm713, %v329, %v584
  %v746 = vsel %vm714, %v332, %v590
  %v747 = vsel %vm715, %v335, %v596
  %v748 = vsel %vm716, %v338, %v602
  %v749 = vsel %vm717, %v341, %v608
  %v750 = vsel %vm718, %v344, %v614
  %v751 = vsel %vm719, %v347, %v620
  %v752 = vsel %vm720, %v350, %v626
  %v753 = vsel %vm721, %v353, %v632
  %v754 = vsel %vm722, %v356, %v638
  %v755 = vsel %vm723, %v359, %v644
  %v756 = vsel %vm724, %v362, %v650
  %v757 = vsel %vm725, %v365, %v656
  %v758 = vsel %vm726, %v368, %v662
  %v791 = vrot.slane %v727, 1
  %v792 = vrot.slane %v727, 2
  %v793 = vrot.slane %v727, 3
  %v794 = vrot.slane %v727, 4
  %v795 = vrot.slane %v727, 5
  %v796 = vrot.slane %v727, 6
  %v797 = vrot.slane %v727, 7
  %v798 = vrot.slane %v728, 1
  %v799 = vrot.slane %v728, 2
  %v800 = vrot.slane %v728, 3
  %v801 = vrot.slane %v728, 4
  %v802 = vrot.slane %v728, 5
  %v803 = vrot.slane %v728, 6
  %v804 = vrot.slane %v728, 7
  %v805 = vrot.slane %v729, 1
  %v806 = vrot.slane %v729, 2
  %v807 = vrot.slane %v729, 3
  %v808 = vrot.slane %v729, 4
  %v809 = vrot.slane %v729, 5
  %v810 = vrot.slane %v729, 6
  %v811 = vrot.slane %v729, 7
  %v812 = vrot.slane %v730, 1
  %v813 = vrot.slane %v730, 2
  %v814 = vrot.slane %v730, 3
  %v815 = vrot.slane %v730, 4
  %v816 = vrot.slane %v730, 5
  %v817 = vrot.slane %v730, 6
  %v818 = vrot.slane %v730, 7
  %v819 = vrot.slane %v731, 1
  %v820 = vrot.slane %v731, 2
  %v821 = vrot.slane %v731, 3
  %v822 = vrot.slane %v731, 4
  %v823 = vrot.slane %v731, 5
  %v824 = vrot.slane %v731, 6
  %v825 = vrot.slane %v731, 7
  %v826 = vrot.slane %v732, 1
  %v827 = vrot.slane %v732, 2
  %v828 = vrot.slane %v732, 3
  %v829 = vrot.slane %v732, 4
  %v830 = vrot.slane %v732, 5
  %v831 = vrot.slane %v732, 6
  %v832 = vrot.slane %v732, 7
  %v833 = vrot.slane %v733, 1
  %v834 = vrot.slane %v733, 2
  %v835 = vrot.slane %v733, 3
  %v836 = vrot.slane %v733, 4
  %v837 = vrot.slane %v733, 5
  %v838 = vrot.slane %v733, 6
  %v839 = vrot.slane %v733, 7
  %v840 = vrot.slane %v734, 1
  %v841 = vrot.slane %v734, 2
  %v842 = vrot.slane %v734, 3
  %v843 = vrot.slane %v734, 4
  %v844 = vrot.slane %v734, 5
  %v845 = vrot.slane %v734, 6
  %v846 = vrot.slane %v734, 7
  %v847 = vrot.slane %v735, 1
  %v848 = vrot.slane %v735, 2
  %v849 = vrot.slane %v735, 3
  %v850 = vrot.slane %v735, 4
  %v851 = vrot.slane %v735, 5
  %v852 = vrot.slane %v735, 6
  %v853 = vrot.slane %v735, 7
  %v854 = vrot.slane %v736, 1
  %v855 = vrot.slane %v736, 2
  %v856 = vrot.slane %v736, 3
  %v857 = vrot.slane %v736, 4
  %v858 = vrot.slane %v736, 5
  %v859 = vrot.slane %v736, 6
  %v860 = vrot.slane %v736, 7
  %v861 = vrot.slane %v737, 1
  %v862 = vrot.slane %v737, 2
  %v863 = vrot.slane %v737, 3
  %v864 = vrot.slane %v737, 4
  %v865 = vrot.slane %v737, 5
  %v866 = vrot.slane %v737, 6
  %v867 = vrot.slane %v737, 7
  %v868 = vrot.slane %v738, 1
  %v869 = vrot.slane %v738, 2
  %v870 = vrot.slane %v738, 3
  %v871 = vrot.slane %v738, 4
  %v872 = vrot.slane %v738, 5
  %v873 = vrot.slane %v738, 6
  %v874 = vrot.slane %v738, 7
  %v875 = vrot.slane %v739, 1
  %v876 = vrot.slane %v739, 2
  %v877 = vrot.slane %v739, 3
  %v878 = vrot.slane %v739, 4
  %v879 = vrot.slane %v739, 5
  %v880 = vrot.slane %v739, 6
  %v881 = vrot.slane %v739, 7
  %v882 = vrot.slane %v740, 1
  %v883 = vrot.slane %v740, 2
  %v884 = vrot.slane %v740, 3
  %v885 = vrot.slane %v740, 4
  %v886 = vrot.slane %v740, 5
  %v887 = vrot.slane %v740, 6
  %v888 = vrot.slane %v740, 7
  %v889 = vrot.slane %v741, 1
  %v890 = vrot.slane %v741, 2
  %v891 = vrot.slane %v741, 3
  %v892 = vrot.slane %v741, 4
  %v893 = vrot.slane %v741, 5
  %v894 = vrot.slane %v741, 6
  %v895 = vrot.slane %v741, 7
  %v896 = vrot.slane %v742, 1
  %v897 = vrot.slane %v742, 2
  %v898 = vrot.slane %v742, 3
  %v899 = vrot.slane %v742, 4
  %v900 = vrot.slane %v742, 5
  %v901 = vrot.slane %v742, 6
  %v902 = vrot.slane %v742, 7
  %v903 = vrot.slane %v743, 1
  %v904 = vrot.slane %v743, 2
  %v905 = vrot.slane %v743, 3
  %v906 = vrot.slane %v743, 4
  %v907 = vrot.slane %v743, 5
  %v908 = vrot.slane %v743, 6
  %v909 = vrot.slane %v743, 7
  %v910 = vrot.slane %v744, 1
  %v911 = vrot.slane %v744, 2
  %v912 = vrot.slane %v744, 3
  %v913 = vrot.slane %v744, 4
  %v914 = vrot.slane %v744, 5
  %v915 = vrot.slane %v744, 6
  %v916 = vrot.slane %v744, 7
  %v917 = vrot.slane %v745, 1
  %v918 = vrot.slane %v745, 2
  %v919 = vrot.slane %v745, 3
  %v920 = vrot.slane %v745, 4
  %v921 = vrot.slane %v745, 5
  %v922 = vrot.slane %v745, 6
  %v923 = vrot.slane %v745, 7
  %v924 = vrot.slane %v746, 1
  %v925 = vrot.slane %v746, 2
  %v926 = vrot.slane %v746, 3
  %v927 = vrot.slane %v746, 4
  %v928 = vrot.slane %v746, 5
  %v929 = vrot.slane %v746, 6
  %v930 = vrot.slane %v746, 7
  %v931 = vrot.slane %v747, 1
  %v932 = vrot.slane %v747, 2
  %v933 = vrot.slane %v747, 3
  %v934 = vrot.slane %v747, 4
  %v935 = vrot.slane %v747, 5
  %v936 = vrot.slane %v747, 6
  %v937 = vrot.slane %v747, 7
  %v938 = vrot.slane %v748, 1
  %v939 = vrot.slane %v748, 2
  %v940 = vrot.slane %v748, 3
  %v941 = vrot.slane %v748, 4
  %v942 = vrot.slane %v748, 5
  %v943 = vrot.slane %v748, 6
  %v944 = vrot.slane %v748, 7
  %v945 = vrot.slane %v749, 1
  %v946 = vrot.slane %v749, 2
  %v947 = vrot.slane %v749, 3
  %v948 = vrot.slane %v749, 4
  %v949 = vrot.slane %v749, 5
  %v950 = vrot.slane %v749, 6
  %v951 = vrot.slane %v749, 7
  %v952 = vrot.slane %v750, 1
  %v953 = vrot.slane %v750, 2
  %v954 = vrot.slane %v750, 3
  %v955 = vrot.slane %v750, 4
  %v956 = vrot.slane %v750, 5
  %v957 = vrot.slane %v750, 6
  %v958 = vrot.slane %v750, 7
  %v959 = vrot.slane %v751, 1
  %v960 = vrot.slane %v751, 2
  %v961 = vrot.slane %v751, 3
  %v962 = vrot.slane %v751, 4
  %v963 = vrot.slane %v751, 5
  %v964 = vrot.slane %v751, 6
  %v965 = vrot.slane %v751, 7
  %v966 = vrot.slane %v752, 1
  %v967 = vrot.slane %v752, 2
  %v968 = vrot.slane %v752, 3
  %v969 = vrot.slane %v752, 4
  %v970 = vrot.slane %v752, 5
  %v971 = vrot.slane %v752, 6
  %v972 = vrot.slane %v752, 7
  %v973 = vrot.slane %v753, 1
  %v974 = vrot.slane %v753, 2
  %v975 = vrot.slane %v753, 3
  %v976 = vrot.slane %v753, 4
  %v977 = vrot.slane %v753, 5
  %v978 = vrot.slane %v753, 6
  %v979 = vrot.slane %v753, 7
  %v980 = vrot.slane %v754, 1
  %v981 = vrot.slane %v754, 2
  %v982 = vrot.slane %v754, 3
  %v983 = vrot.slane %v754, 4
  %v984 = vrot.slane %v754, 5
  %v985 = vrot.slane %v754, 6
  %v986 = vrot.slane %v754, 7
  %v987 = vrot.slane %v755, 1
  %v988 = vrot.slane %v755, 2
  %v989 = vrot.slane %v755, 3
  %v990 = vrot.slane %v755, 4
  %v991 = vrot.slane %v755, 5
  %v992 = vrot.slane %v755, 6
  %v993 = vrot.slane %v755, 7
  %v994 = vrot.slane %v756, 1
  %v995 = vrot.slane %v756, 2
  %v996 = vrot.slane %v756, 3
  %v997 = vrot.slane %v756, 4
  %v998 = vrot.slane %v756, 5
  %v999 = vrot.slane %v756, 6
  %v1000 = vrot.slane %v756, 7
  %v1001 = vrot.slane %v757, 1
  %v1002 = vrot.slane %v757, 2
  %v1003 = vrot.slane %v757, 3
  %v1004 = vrot.slane %v757, 4
  %v1005 = vrot.slane %v757, 5
  %v1006 = vrot.slane %v757, 6
  %v1007 = vrot.slane %v757, 7
  %v1008 = vrot.slane %v758, 1
  %v1009 = vrot.slane %v758, 2
  %v1010 = vrot.slane %v758, 3
  %v1011 = vrot.slane %v758, 4
  %v1012 = vrot.slane %v758, 5
  %v1013 = vrot.slane %v758, 6
  %v1014 = vrot.slane %v758, 7
  %1015 = vst [vmem:[#allocation1] ss:$9 sm:$0xff] %v727
  %s1016 = scalar_lea.vmem [#allocation1], 1
  %1017 = vst [vmem:[%s1016] ss:$9 sm:$0xff] %v791
  %s1018 = scalar_lea.vmem [#allocation1], 2
  %1019 = vst [vmem:[%s1018] ss:$9 sm:$0xff] %v792
  %s1020 = scalar_lea.vmem [#allocation1], 3
  %1021 = vst [vmem:[%s1020] ss:$9 sm:$0xff] %v793
  %s1022 = scalar_lea.vmem [#allocation1], 4
  %1023 = vst [vmem:[%s1022] ss:$9 sm:$0xff] %v794
  %s1024 = scalar_lea.vmem [#allocation1], 5
  %1025 = vst [vmem:[%s1024] ss:$9 sm:$0xff] %v795
  %s1026 = scalar_lea.vmem [#allocation1], 6
  %1027 = vst [vmem:[%s1026] ss:$9 sm:$0xff] %v796
  %s1028 = scalar_lea.vmem [#allocation1], 7
  %1029 = vst [vmem:[%s1028] ss:$9 sm:$0xff] %v797
  %v1030 = vld [vmem:[#allocation1] sm:$0xff]
  %1031 = vst [vmem:[#allocation1] ss:$9 sm:$0xff] %v728
  %1032 = vst [vmem:[%s1016] ss:$9 sm:$0xff] %v798
  %1033 = vst [vmem:[%s1018] ss:$9 sm:$0xff] %v799
  %1034 = vst [vmem:[%s1020] ss:$9 sm:$0xff] %v800
  %1035 = vst [vmem:[%s1022] ss:$9 sm:$0xff] %v801
  %1036 = vst [vmem:[%s1024] ss:$9 sm:$0xff] %v802
  %1037 = vst [vmem:[%s1026] ss:$9 sm:$0xff] %v803
  %1038 = vst [vmem:[%s1028] ss:$9 sm:$0xff] %v804
  %v1039 = vld [vmem:[#allocation1] sm:$0xff]
  %1040 = vst [vmem:[#allocation1] ss:$9 sm:$0xff] %v729
  %1041 = vst [vmem:[%s1016] ss:$9 sm:$0xff] %v805
  %1042 = vst [vmem:[%s1018] ss:$9 sm:$0xff] %v806
  %1043 = vst [vmem:[%s1020] ss:$9 sm:$0xff] %v807
  %1044 = vst [vmem:[%s1022] ss:$9 sm:$0xff] %v808
  %1045 = vst [vmem:[%s1024] ss:$9 sm:$0xff] %v809
  %1046 = vst [vmem:[%s1026] ss:$9 sm:$0xff] %v810
  %1047 = vst [vmem:[%s1028] ss:$9 sm:$0xff] %v811
  %v1048 = vld [vmem:[#allocation1] sm:$0xff]
  %1049 = vst [vmem:[#allocation1] ss:$9 sm:$0xff] %v730
  %1050 = vst [vmem:[%s1016] ss:$9 sm:$0xff] %v812
  %1051 = vst [vmem:[%s1018] ss:$9 sm:$0xff] %v813
  %1052 = vst [vmem:[%s1020] ss:$9 sm:$0xff] %v814
  %1053 = vst [vmem:[%s1022] ss:$9 sm:$0xff] %v815
  %1054 = vst [vmem:[%s1024] ss:$9 sm:$0xff] %v816
  %1055 = vst [vmem:[%s1026] ss:$9 sm:$0xff] %v817
  %1056 = vst [vmem:[%s1028] ss:$9 sm:$0xff] %v818
  %v1057 = vld [vmem:[#allocation1] sm:$0xff]
  %1058 = vst [vmem:[#allocation1] ss:$9 sm:$0xff] %v731
  %1059 = vst [vmem:[%s1016] ss:$9 sm:$0xff] %v819
  %1060 = vst [vmem:[%s1018] ss:$9 sm:$0xff] %v820
  %1061 = vst [vmem:[%s1020] ss:$9 sm:$0xff] %v821
  %1062 = vst [vmem:[%s1022] ss:$9 sm:$0xff] %v822
  %1063 = vst [vmem:[%s1024] ss:$9 sm:$0xff] %v823
  %1064 = vst [vmem:[%s1026] ss:$9 sm:$0xff] %v824
  %1065 = vst [vmem:[%s1028] ss:$9 sm:$0xff] %v825
  %v1066 = vld [vmem:[#allocation1] sm:$0xff]
  %1067 = vst [vmem:[#allocation1] ss:$9 sm:$0xff] %v732
  %1068 = vst [vmem:[%s1016] ss:$9 sm:$0xff] %v826
  %1069 = vst [vmem:[%s1018] ss:$9 sm:$0xff] %v827
  %1070 = vst [vmem:[%s1020] ss:$9 sm:$0xff] %v828
  %1071 = vst [vmem:[%s1022] ss:$9 sm:$0xff] %v829
  %1072 = vst [vmem:[%s1024] ss:$9 sm:$0xff] %v830
  %1073 = vst [vmem:[%s1026] ss:$9 sm:$0xff] %v831
  %1074 = vst [vmem:[%s1028] ss:$9 sm:$0xff] %v832
  %v1075 = vld [vmem:[#allocation1] sm:$0xff]
  %1076 = vst [vmem:[#allocation1] ss:$9 sm:$0xff] %v733
  %1077 = vst [vmem:[%s1016] ss:$9 sm:$0xff] %v833
  %1078 = vst [vmem:[%s1018] ss:$9 sm:$0xff] %v834
  %1079 = vst [vmem:[%s1020] ss:$9 sm:$0xff] %v835
  %1080 = vst [vmem:[%s1022] ss:$9 sm:$0xff] %v836
  %1081 = vst [vmem:[%s1024] ss:$9 sm:$0xff] %v837
  %1082 = vst [vmem:[%s1026] ss:$9 sm:$0xff] %v838
  %1083 = vst [vmem:[%s1028] ss:$9 sm:$0xff] %v839
  %v1084 = vld [vmem:[#allocation1] sm:$0xff]
  %1085 = vst [vmem:[#allocation1] ss:$9 sm:$0xff] %v734
  %1086 = vst [vmem:[%s1016] ss:$9 sm:$0xff] %v840
  %1087 = vst [vmem:[%s1018] ss:$9 sm:$0xff] %v841
  %1088 = vst [vmem:[%s1020] ss:$9 sm:$0xff] %v842
  %1089 = vst [vmem:[%s1022] ss:$9 sm:$0xff] %v843
  %1090 = vst [vmem:[%s1024] ss:$9 sm:$0xff] %v844
  %1091 = vst [vmem:[%s1026] ss:$9 sm:$0xff] %v845
  %1092 = vst [vmem:[%s1028] ss:$9 sm:$0xff] %v846
  %v1093 = vld [vmem:[#allocation1] sm:$0xff]
  %1094 = vst [vmem:[#allocation1] ss:$9 sm:$0xff] %v735
  %1095 = vst [vmem:[%s1016] ss:$9 sm:$0xff] %v847
  %1096 = vst [vmem:[%s1018] ss:$9 sm:$0xff] %v848
  %1097 = vst [vmem:[%s1020] ss:$9 sm:$0xff] %v849
  %1098 = vst [vmem:[%s1022] ss:$9 sm:$0xff] %v850
  %1099 = vst [vmem:[%s1024] ss:$9 sm:$0xff] %v851
  %1100 = vst [vmem:[%s1026] ss:$9 sm:$0xff] %v852
  %1101 = vst [vmem:[%s1028] ss:$9 sm:$0xff] %v853
  %v1102 = vld [vmem:[#allocation1] sm:$0xff]
  %1103 = vst [vmem:[#allocation1] ss:$9 sm:$0xff] %v736
  %1104 = vst [vmem:[%s1016] ss:$9 sm:$0xff] %v854
  %1105 = vst [vmem:[%s1018] ss:$9 sm:$0xff] %v855
  %1106 = vst [vmem:[%s1020] ss:$9 sm:$0xff] %v856
  %1107 = vst [vmem:[%s1022] ss:$9 sm:$0xff] %v857
  %1108 = vst [vmem:[%s1024] ss:$9 sm:$0xff] %v858
  %1109 = vst [vmem:[%s1026] ss:$9 sm:$0xff] %v859
  %1110 = vst [vmem:[%s1028] ss:$9 sm:$0xff] %v860
  %v1111 = vld [vmem:[#allocation1] sm:$0xff]
  %1112 = vst [vmem:[#allocation1] ss:$9 sm:$0xff] %v737
  %1113 = vst [vmem:[%s1016] ss:$9 sm:$0xff] %v861
  %1114 = vst [vmem:[%s1018] ss:$9 sm:$0xff] %v862
  %1115 = vst [vmem:[%s1020] ss:$9 sm:$0xff] %v863
  %1116 = vst [vmem:[%s1022] ss:$9 sm:$0xff] %v864
  %1117 = vst [vmem:[%s1024] ss:$9 sm:$0xff] %v865
  %1118 = vst [vmem:[%s1026] ss:$9 sm:$0xff] %v866
  %1119 = vst [vmem:[%s1028] ss:$9 sm:$0xff] %v867
  %v1120 = vld [vmem:[#allocation1] sm:$0xff]
  %1121 = vst [vmem:[#allocation1] ss:$9 sm:$0xff] %v738
  %1122 = vst [vmem:[%s1016] ss:$9 sm:$0xff] %v868
  %1123 = vst [vmem:[%s1018] ss:$9 sm:$0xff] %v869
  %1124 = vst [vmem:[%s1020] ss:$9 sm:$0xff] %v870
  %1125 = vst [vmem:[%s1022] ss:$9 sm:$0xff] %v871
  %1126 = vst [vmem:[%s1024] ss:$9 sm:$0xff] %v872
  %1127 = vst [vmem:[%s1026] ss:$9 sm:$0xff] %v873
  %1128 = vst [vmem:[%s1028] ss:$9 sm:$0xff] %v874
  %v1129 = vld [vmem:[#allocation1] sm:$0xff]
  %1130 = vst [vmem:[#allocation1] ss:$9 sm:$0xff] %v739
  %1131 = vst [vmem:[%s1016] ss:$9 sm:$0xff] %v875
  %1132 = vst [vmem:[%s1018] ss:$9 sm:$0xff] %v876
  %1133 = vst [vmem:[%s1020] ss:$9 sm:$0xff] %v877
  %1134 = vst [vmem:[%s1022] ss:$9 sm:$0xff] %v878
  %1135 = vst [vmem:[%s1024] ss:$9 sm:$0xff] %v879
  %1136 = vst [vmem:[%s1026] ss:$9 sm:$0xff] %v880
  %1137 = vst [vmem:[%s1028] ss:$9 sm:$0xff] %v881
  %v1138 = vld [vmem:[#allocation1] sm:$0xff]
  %1139 = vst [vmem:[#allocation1] ss:$9 sm:$0xff] %v740
  %1140 = vst [vmem:[%s1016] ss:$9 sm:$0xff] %v882
  %1141 = vst [vmem:[%s1018] ss:$9 sm:$0xff] %v883
  %1142 = vst [vmem:[%s1020] ss:$9 sm:$0xff] %v884
  %1143 = vst [vmem:[%s1022] ss:$9 sm:$0xff] %v885
  %1144 = vst [vmem:[%s1024] ss:$9 sm:$0xff] %v886
  %1145 = vst [vmem:[%s1026] ss:$9 sm:$0xff] %v887
  %1146 = vst [vmem:[%s1028] ss:$9 sm:$0xff] %v888
  %v1147 = vld [vmem:[#allocation1] sm:$0xff]
  %1148 = vst [vmem:[#allocation1] ss:$9 sm:$0xff] %v741
  %1149 = vst [vmem:[%s1016] ss:$9 sm:$0xff] %v889
  %1150 = vst [vmem:[%s1018] ss:$9 sm:$0xff] %v890
  %1151 = vst [vmem:[%s1020] ss:$9 sm:$0xff] %v891
  %1152 = vst [vmem:[%s1022] ss:$9 sm:$0xff] %v892
  %1153 = vst [vmem:[%s1024] ss:$9 sm:$0xff] %v893
  %1154 = vst [vmem:[%s1026] ss:$9 sm:$0xff] %v894
  %1155 = vst [vmem:[%s1028] ss:$9 sm:$0xff] %v895
  %v1156 = vld [vmem:[#allocation1] sm:$0xff]
  %1157 = vst [vmem:[#allocation1] ss:$9 sm:$0xff] %v742
  %1158 = vst [vmem:[%s1016] ss:$9 sm:$0xff] %v896
  %1159 = vst [vmem:[%s1018] ss:$9 sm:$0xff] %v897
  %1160 = vst [vmem:[%s1020] ss:$9 sm:$0xff] %v898
  %1161 = vst [vmem:[%s1022] ss:$9 sm:$0xff] %v899
  %1162 = vst [vmem:[%s1024] ss:$9 sm:$0xff] %v900
  %1163 = vst [vmem:[%s1026] ss:$9 sm:$0xff] %v901
  %1164 = vst [vmem:[%s1028] ss:$9 sm:$0xff] %v902
  %v1165 = vld [vmem:[#allocation1] sm:$0xff]
  %1166 = vst [vmem:[#allocation1] ss:$9 sm:$0xff] %v743
  %1167 = vst [vmem:[%s1016] ss:$9 sm:$0xff] %v903
  %1168 = vst [vmem:[%s1018] ss:$9 sm:$0xff] %v904
  %1169 = vst [vmem:[%s1020] ss:$9 sm:$0xff] %v905
  %1170 = vst [vmem:[%s1022] ss:$9 sm:$0xff] %v906
  %1171 = vst [vmem:[%s1024] ss:$9 sm:$0xff] %v907
  %1172 = vst [vmem:[%s1026] ss:$9 sm:$0xff] %v908
  %1173 = vst [vmem:[%s1028] ss:$9 sm:$0xff] %v909
  %v1174 = vld [vmem:[#allocation1] sm:$0xff]
  %1175 = vst [vmem:[#allocation1] ss:$9 sm:$0xff] %v744
  %1176 = vst [vmem:[%s1016] ss:$9 sm:$0xff] %v910
  %1177 = vst [vmem:[%s1018] ss:$9 sm:$0xff] %v911
  %1178 = vst [vmem:[%s1020] ss:$9 sm:$0xff] %v912
  %1179 = vst [vmem:[%s1022] ss:$9 sm:$0xff] %v913
  %1180 = vst [vmem:[%s1024] ss:$9 sm:$0xff] %v914
  %1181 = vst [vmem:[%s1026] ss:$9 sm:$0xff] %v915
  %1182 = vst [vmem:[%s1028] ss:$9 sm:$0xff] %v916
  %v1183 = vld [vmem:[#allocation1] sm:$0xff]
  %1184 = vst [vmem:[#allocation1] ss:$9 sm:$0xff] %v745
  %1185 = vst [vmem:[%s1016] ss:$9 sm:$0xff] %v917
  %1186 = vst [vmem:[%s1018] ss:$9 sm:$0xff] %v918
  %1187 = vst [vmem:[%s1020] ss:$9 sm:$0xff] %v919
  %1188 = vst [vmem:[%s1022] ss:$9 sm:$0xff] %v920
  %1189 = vst [vmem:[%s1024] ss:$9 sm:$0xff] %v921
  %1190 = vst [vmem:[%s1026] ss:$9 sm:$0xff] %v922
  %1191 = vst [vmem:[%s1028] ss:$9 sm:$0xff] %v923
  %v1192 = vld [vmem:[#allocation1] sm:$0xff]
  %1193 = vst [vmem:[#allocation1] ss:$9 sm:$0xff] %v746
  %1194 = vst [vmem:[%s1016] ss:$9 sm:$0xff] %v924
  %1195 = vst [vmem:[%s1018] ss:$9 sm:$0xff] %v925
  %1196 = vst [vmem:[%s1020] ss:$9 sm:$0xff] %v926
  %1197 = vst [vmem:[%s1022] ss:$9 sm:$0xff] %v927
  %1198 = vst [vmem:[%s1024] ss:$9 sm:$0xff] %v928
  %1199 = vst [vmem:[%s1026] ss:$9 sm:$0xff] %v929
  %1200 = vst [vmem:[%s1028] ss:$9 sm:$0xff] %v930
  %v1201 = vld [vmem:[#allocation1] sm:$0xff]
  %1202 = vst [vmem:[#allocation1] ss:$9 sm:$0xff] %v747
  %1203 = vst [vmem:[%s1016] ss:$9 sm:$0xff] %v931
  %1204 = vst [vmem:[%s1018] ss:$9 sm:$0xff] %v932
  %1205 = vst [vmem:[%s1020] ss:$9 sm:$0xff] %v933
  %1206 = vst [vmem:[%s1022] ss:$9 sm:$0xff] %v934
  %1207 = vst [vmem:[%s1024] ss:$9 sm:$0xff] %v935
  %1208 = vst [vmem:[%s1026] ss:$9 sm:$0xff] %v936
  %1209 = vst [vmem:[%s1028] ss:$9 sm:$0xff] %v937
  %v1210 = vld [vmem:[#allocation1] sm:$0xff]
  %1211 = vst [vmem:[#allocation1] ss:$9 sm:$0xff] %v748
  %1212 = vst [vmem:[%s1016] ss:$9 sm:$0xff] %v938
  %1213 = vst [vmem:[%s1018] ss:$9 sm:$0xff] %v939
  %1214 = vst [vmem:[%s1020] ss:$9 sm:$0xff] %v940
  %1215 = vst [vmem:[%s1022] ss:$9 sm:$0xff] %v941
  %1216 = vst [vmem:[%s1024] ss:$9 sm:$0xff] %v942
  %1217 = vst [vmem:[%s1026] ss:$9 sm:$0xff] %v943
  %1218 = vst [vmem:[%s1028] ss:$9 sm:$0xff] %v944
  %v1219 = vld [vmem:[#allocation1] sm:$0xff]
  %1220 = vst [vmem:[#allocation1] ss:$9 sm:$0xff] %v749
  %1221 = vst [vmem:[%s1016] ss:$9 sm:$0xff] %v945
  %1222 = vst [vmem:[%s1018] ss:$9 sm:$0xff] %v946
  %1223 = vst [vmem:[%s1020] ss:$9 sm:$0xff] %v947
  %1224 = vst [vmem:[%s1022] ss:$9 sm:$0xff] %v948
  %1225 = vst [vmem:[%s1024] ss:$9 sm:$0xff] %v949
  %1226 = vst [vmem:[%s1026] ss:$9 sm:$0xff] %v950
  %1227 = vst [vmem:[%s1028] ss:$9 sm:$0xff] %v951
  %v1228 = vld [vmem:[#allocation1] sm:$0xff]
  %1229 = vst [vmem:[#allocation1] ss:$9 sm:$0xff] %v750
  %1230 = vst [vmem:[%s1016] ss:$9 sm:$0xff] %v952
  %1231 = vst [vmem:[%s1018] ss:$9 sm:$0xff] %v953
  %1232 = vst [vmem:[%s1020] ss:$9 sm:$0xff] %v954
  %1233 = vst [vmem:[%s1022] ss:$9 sm:$0xff] %v955
  %1234 = vst [vmem:[%s1024] ss:$9 sm:$0xff] %v956
  %1235 = vst [vmem:[%s1026] ss:$9 sm:$0xff] %v957
  %1236 = vst [vmem:[%s1028] ss:$9 sm:$0xff] %v958
  %v1237 = vld [vmem:[#allocation1] sm:$0xff]
  %1238 = vst [vmem:[#allocation1] ss:$9 sm:$0xff] %v751
  %1239 = vst [vmem:[%s1016] ss:$9 sm:$0xff] %v959
  %1240 = vst [vmem:[%s1018] ss:$9 sm:$0xff] %v960
  %1241 = vst [vmem:[%s1020] ss:$9 sm:$0xff] %v961
  %1242 = vst [vmem:[%s1022] ss:$9 sm:$0xff] %v962
  %1243 = vst [vmem:[%s1024] ss:$9 sm:$0xff] %v963
  %1244 = vst [vmem:[%s1026] ss:$9 sm:$0xff] %v964
  %1245 = vst [vmem:[%s1028] ss:$9 sm:$0xff] %v965
  %v1246 = vld [vmem:[#allocation1] sm:$0xff]
  %1247 = vst [vmem:[#allocation1] ss:$9 sm:$0xff] %v752
  %1248 = vst [vmem:[%s1016] ss:$9 sm:$0xff] %v966
  %1249 = vst [vmem:[%s1018] ss:$9 sm:$0xff] %v967
  %1250 = vst [vmem:[%s1020] ss:$9 sm:$0xff] %v968
  %1251 = vst [vmem:[%s1022] ss:$9 sm:$0xff] %v969
  %1252 = vst [vmem:[%s1024] ss:$9 sm:$0xff] %v970
  %1253 = vst [vmem:[%s1026] ss:$9 sm:$0xff] %v971
  %1254 = vst [vmem:[%s1028] ss:$9 sm:$0xff] %v972
  %v1255 = vld [vmem:[#allocation1] sm:$0xff]
  %1256 = vst [vmem:[#allocation1] ss:$9 sm:$0xff] %v753
  %1257 = vst [vmem:[%s1016] ss:$9 sm:$0xff] %v973
  %1258 = vst [vmem:[%s1018] ss:$9 sm:$0xff] %v974
  %1259 = vst [vmem:[%s1020] ss:$9 sm:$0xff] %v975
  %1260 = vst [vmem:[%s1022] ss:$9 sm:$0xff] %v976
  %1261 = vst [vmem:[%s1024] ss:$9 sm:$0xff] %v977
  %1262 = vst [vmem:[%s1026] ss:$9 sm:$0xff] %v978
  %1263 = vst [vmem:[%s1028] ss:$9 sm:$0xff] %v979
  %v1264 = vld [vmem:[#allocation1] sm:$0xff]
  %1265 = vst [vmem:[#allocation1] ss:$9 sm:$0xff] %v754
  %1266 = vst [vmem:[%s1016] ss:$9 sm:$0xff] %v980
  %1267 = vst [vmem:[%s1018] ss:$9 sm:$0xff] %v981
  %1268 = vst [vmem:[%s1020] ss:$9 sm:$0xff] %v982
  %1269 = vst [vmem:[%s1022] ss:$9 sm:$0xff] %v983
  %1270 = vst [vmem:[%s1024] ss:$9 sm:$0xff] %v984
  %1271 = vst [vmem:[%s1026] ss:$9 sm:$0xff] %v985
  %1272 = vst [vmem:[%s1028] ss:$9 sm:$0xff] %v986
  %v1273 = vld [vmem:[#allocation1] sm:$0xff]
  %1274 = vst [vmem:[#allocation1] ss:$9 sm:$0xff] %v755
  %1275 = vst [vmem:[%s1016] ss:$9 sm:$0xff] %v987
  %1276 = vst [vmem:[%s1018] ss:$9 sm:$0xff] %v988
  %1277 = vst [vmem:[%s1020] ss:$9 sm:$0xff] %v989
  %1278 = vst [vmem:[%s1022] ss:$9 sm:$0xff] %v990
  %1279 = vst [vmem:[%s1024] ss:$9 sm:$0xff] %v991
  %1280 = vst [vmem:[%s1026] ss:$9 sm:$0xff] %v992
  %1281 = vst [vmem:[%s1028] ss:$9 sm:$0xff] %v993
  %v1282 = vld [vmem:[#allocation1] sm:$0xff]
  %1283 = vst [vmem:[#allocation1] ss:$9 sm:$0xff] %v756
  %1284 = vst [vmem:[%s1016] ss:$9 sm:$0xff] %v994
  %1285 = vst [vmem:[%s1018] ss:$9 sm:$0xff] %v995
  %1286 = vst [vmem:[%s1020] ss:$9 sm:$0xff] %v996
  %1287 = vst [vmem:[%s1022] ss:$9 sm:$0xff] %v997
  %1288 = vst [vmem:[%s1024] ss:$9 sm:$0xff] %v998
  %1289 = vst [vmem:[%s1026] ss:$9 sm:$0xff] %v999
  %1290 = vst [vmem:[%s1028] ss:$9 sm:$0xff] %v1000
  %v1291 = vld [vmem:[#allocation1] sm:$0xff]
  %1292 = vst [vmem:[#allocation1] ss:$9 sm:$0xff] %v757
  %1293 = vst [vmem:[%s1016] ss:$9 sm:$0xff] %v1001
  %1294 = vst [vmem:[%s1018] ss:$9 sm:$0xff] %v1002
  %1295 = vst [vmem:[%s1020] ss:$9 sm:$0xff] %v1003
  %1296 = vst [vmem:[%s1022] ss:$9 sm:$0xff] %v1004
  %1297 = vst [vmem:[%s1024] ss:$9 sm:$0xff] %v1005
  %1298 = vst [vmem:[%s1026] ss:$9 sm:$0xff] %v1006
  %1299 = vst [vmem:[%s1028] ss:$9 sm:$0xff] %v1007
  %v1300 = vld [vmem:[#allocation1] sm:$0xff]
  %1301 = vst [vmem:[#allocation1] ss:$9 sm:$0xff] %v758
  %1302 = vst [vmem:[%s1016] ss:$9 sm:$0xff] %v1008
  %1303 = vst [vmem:[%s1018] ss:$9 sm:$0xff] %v1009
  %1304 = vst [vmem:[%s1020] ss:$9 sm:$0xff] %v1010
  %1305 = vst [vmem:[%s1022] ss:$9 sm:$0xff] %v1011
  %1306 = vst [vmem:[%s1024] ss:$9 sm:$0xff] %v1012
  %1307 = vst [vmem:[%s1026] ss:$9 sm:$0xff] %v1013
  %1308 = vst [vmem:[%s1028] ss:$9 sm:$0xff] %v1014
  %v1309 = vld [vmem:[#allocation1] sm:$0xff]
  %1310 = vset.pattern.permute.xlu0 0
  %1311 = vperm.xlu0 %1310, %v1030
  %v1312 = vpop.permute.xlu0 %1311
  %1313 = vset.pattern.permute.xlu0 0
  %1314 = vperm.xlu0 %1313, %v1039
  %v1315 = vpop.permute.xlu0 %1314
  %1316 = vset.pattern.permute.xlu0 0
  %1317 = vperm.xlu0 %1316, %v1048
  %v1318 = vpop.permute.xlu0 %1317
  %1319 = vset.pattern.permute.xlu0 0
  %1320 = vperm.xlu0 %1319, %v1057
  %v1321 = vpop.permute.xlu0 %1320
  %1322 = vset.pattern.permute.xlu0 0
  %1323 = vperm.xlu0 %1322, %v1066
  %v1324 = vpop.permute.xlu0 %1323
  %1325 = vset.pattern.permute.xlu0 0
  %1326 = vperm.xlu0 %1325, %v1075
  %v1327 = vpop.permute.xlu0 %1326
  %1328 = vset.pattern.permute.xlu0 0
  %1329 = vperm.xlu0 %1328, %v1084
  %v1330 = vpop.permute.xlu0 %1329
  %1331 = vset.pattern.permute.xlu0 0
  %1332 = vperm.xlu0 %1331, %v1093
  %v1333 = vpop.permute.xlu0 %1332
  %1334 = vset.pattern.permute.xlu0 0
  %1335 = vperm.xlu0 %1334, %v1102
  %v1336 = vpop.permute.xlu0 %1335
  %1337 = vset.pattern.permute.xlu0 0
  %1338 = vperm.xlu0 %1337, %v1111
  %v1339 = vpop.permute.xlu0 %1338
  %1340 = vset.pattern.permute.xlu0 0
  %1341 = vperm.xlu0 %1340, %v1120
  %v1342 = vpop.permute.xlu0 %1341
  %1343 = vset.pattern.permute.xlu0 0
  %1344 = vperm.xlu0 %1343, %v1129
  %v1345 = vpop.permute.xlu0 %1344
  %1346 = vset.pattern.permute.xlu0 0
  %1347 = vperm.xlu0 %1346, %v1138
  %v1348 = vpop.permute.xlu0 %1347
  %1349 = vset.pattern.permute.xlu0 0
  %1350 = vperm.xlu0 %1349, %v1147
  %v1351 = vpop.permute.xlu0 %1350
  %1352 = vset.pattern.permute.xlu0 0
  %1353 = vperm.xlu0 %1352, %v1156
  %v1354 = vpop.permute.xlu0 %1353
  %1355 = vset.pattern.permute.xlu0 0
  %1356 = vperm.xlu0 %1355, %v1165
  %v1357 = vpop.permute.xlu0 %1356
  %1358 = vset.pattern.permute.xlu0 0
  %1359 = vperm.xlu0 %1358, %v1174
  %v1360 = vpop.permute.xlu0 %1359
  %1361 = vset.pattern.permute.xlu0 0
  %1362 = vperm.xlu0 %1361, %v1183
  %v1363 = vpop.permute.xlu0 %1362
  %1364 = vset.pattern.permute.xlu0 0
  %1365 = vperm.xlu0 %1364, %v1192
  %v1366 = vpop.permute.xlu0 %1365
  %1367 = vset.pattern.permute.xlu0 0
  %1368 = vperm.xlu0 %1367, %v1201
  %v1369 = vpop.permute.xlu0 %1368
  %1370 = vset.pattern.permute.xlu0 0
  %1371 = vperm.xlu0 %1370, %v1210
  %v1372 = vpop.permute.xlu0 %1371
  %1373 = vset.pattern.permute.xlu0 0
  %1374 = vperm.xlu0 %1373, %v1219
  %v1375 = vpop.permute.xlu0 %1374
  %1376 = vset.pattern.permute.xlu0 0
  %1377 = vperm.xlu0 %1376, %v1228
  %v1378 = vpop.permute.xlu0 %1377
  %1379 = vset.pattern.permute.xlu0 0
  %1380 = vperm.xlu0 %1379, %v1237
  %v1381 = vpop.permute.xlu0 %1380
  %1382 = vset.pattern.permute.xlu0 0
  %1383 = vperm.xlu0 %1382, %v1246
  %v1384 = vpop.permute.xlu0 %1383
  %1385 = vset.pattern.permute.xlu0 0
  %1386 = vperm.xlu0 %1385, %v1255
  %v1387 = vpop.permute.xlu0 %1386
  %1388 = vset.pattern.permute.xlu0 0
  %1389 = vperm.xlu0 %1388, %v1264
  %v1390 = vpop.permute.xlu0 %1389
  %1391 = vset.pattern.permute.xlu0 0
  %1392 = vperm.xlu0 %1391, %v1273
  %v1393 = vpop.permute.xlu0 %1392
  %1394 = vset.pattern.permute.xlu0 0
  %1395 = vperm.xlu0 %1394, %v1282
  %v1396 = vpop.permute.xlu0 %1395
  %1397 = vset.pattern.permute.xlu0 0
  %1398 = vperm.xlu0 %1397, %v1291
  %v1399 = vpop.permute.xlu0 %1398
  %1400 = vset.pattern.permute.xlu0 0
  %1401 = vperm.xlu0 %1400, %v1300
  %v1402 = vpop.permute.xlu0 %1401
  %1403 = vset.pattern.permute.xlu0 0
  %1404 = vperm.xlu0 %1403, %v1309
  %v1405 = vpop.permute.xlu0 %1404
  %v1406 = vlaneseq
  %v1407 = vand.u32 %v1406, 127
  %v1408 = vperm.slane %v1312, %v1407
  %v1409 = vadd.s32 %v1407, 4294967288
  %v1410 = vperm.slane %v1315, %v1409
  %vm1411 = vcmask 130112
  %v1412 = vsel %vm1411, %v1410, %v1408
  %v1413 = vadd.s32 %v1407, 4294967280
  %v1414 = vperm.slane %v1318, %v1413
  %vm1415 = vcmask 195712
  %v1416 = vsel %vm1415, %v1414, %v1412
  %v1417 = vadd.s32 %v1407, 4294967272
  %v1418 = vperm.slane %v1321, %v1417
  %vm1419 = vcmask 261312
  %v1420 = vsel %vm1419, %v1418, %v1416
  %v1421 = vadd.s32 %v1407, 4294967264
  %v1422 = vperm.slane %v1324, %v1421
  %vm1423 = vcmask 326912
  %v1424 = vsel %vm1423, %v1422, %v1420
  %v1425 = vadd.s32 %v1407, 4294967256
  %v1426 = vperm.slane %v1327, %v1425
  %vm1427 = vcmask 392512
  %v1428 = vsel %vm1427, %v1426, %v1424
  %v1429 = vadd.s32 %v1407, 4294967248
  %v1430 = vperm.slane %v1330, %v1429
  %vm1431 = vcmask 458112
  %v1432 = vsel %vm1431, %v1430, %v1428
  %v1433 = vadd.s32 %v1407, 4294967240
  %v1434 = vperm.slane %v1333, %v1433
  %vm1435 = vcmask 523712
  %v1436 = vsel %vm1435, %v1434, %v1432
  %v1437 = vadd.s32 %v1407, 4294967232
  %v1438 = vperm.slane %v1336, %v1437
  %vm1439 = vcmask 589312
  %v1440 = vsel %vm1439, %v1438, %v1436
  %v1441 = vadd.s32 %v1407, 4294967224
  %v1442 = vperm.slane %v1339, %v1441
  %vm1443 = vcmask 654912
  %v1444 = vsel %vm1443, %v1442, %v1440
  %v1445 = vadd.s32 %v1407, 4294967216
  %v1446 = vperm.slane %v1342, %v1445
  %vm1447 = vcmask 720512
  %v1448 = vsel %vm1447, %v1446, %v1444
  %v1449 = vadd.s32 %v1407, 4294967208
  %v1450 = vperm.slane %v1345, %v1449
  %vm1451 = vcmask 786112
  %v1452 = vsel %vm1451, %v1450, %v1448
  %v1453 = vadd.s32 %v1407, 4294967200
  %v1454 = vperm.slane %v1348, %v1453
  %vm1455 = vcmask 851712
  %v1456 = vsel %vm1455, %v1454, %v1452
  %v1457 = vadd.s32 %v1407, 4294967192
  %v1458 = vperm.slane %v1351, %v1457
  %vm1459 = vcmask 917312
  %v1460 = vsel %vm1459, %v1458, %v1456
  %v1461 = vadd.s32 %v1407, 4294967184
  %v1462 = vperm.slane %v1354, %v1461
  %vm1463 = vcmask 982912
  %v1464 = vsel %vm1463, %v1462, %v1460
  %v1465 = vadd.s32 %v1407, 4294967176
  %v1466 = vperm.slane %v1357, %v1465
  %vm1467 = vcmask 1048512
  %v1468 = vsel %vm1467, %v1466, %v1464
  %v1469 = vperm.slane %v1360, %v1407
  %v1470 = vperm.slane %v1363, %v1409
  %v1471 = vsel %vm1411, %v1470, %v1469
  %v1472 = vperm.slane %v1366, %v1413
  %v1473 = vsel %vm1415, %v1472, %v1471
  %v1474 = vperm.slane %v1369, %v1417
  %v1475 = vsel %vm1419, %v1474, %v1473
  %v1476 = vperm.slane %v1372, %v1421
  %v1477 = vsel %vm1423, %v1476, %v1475
  %v1478 = vperm.slane %v1375, %v1425
  %v1479 = vsel %vm1427, %v1478, %v1477
  %v1480 = vperm.slane %v1378, %v1429
  %v1481 = vsel %vm1431, %v1480, %v1479
  %v1482 = vperm.slane %v1381, %v1433
  %v1483 = vsel %vm1435, %v1482, %v1481
  %v1484 = vperm.slane %v1384, %v1437
  %v1485 = vsel %vm1439, %v1484, %v1483
  %v1486 = vperm.slane %v1387, %v1441
  %v1487 = vsel %vm1443, %v1486, %v1485
  %v1488 = vperm.slane %v1390, %v1445
  %v1489 = vsel %vm1447, %v1488, %v1487
  %v1490 = vperm.slane %v1393, %v1449
  %v1491 = vsel %vm1451, %v1490, %v1489
  %v1492 = vperm.slane %v1396, %v1453
  %v1493 = vsel %vm1455, %v1492, %v1491
  %v1494 = vperm.slane %v1399, %v1457
  %v1495 = vsel %vm1459, %v1494, %v1493
  %v1496 = vperm.slane %v1402, %v1461
  %v1497 = vsel %vm1463, %v1496, %v1495
  %v1498 = vperm.slane %v1405, %v1465
  %v1499 = vsel %vm1467, %v1498, %v1497
  %v1500 = vrot.slane %v1499, 7
  %v1501 = vsel %vm155, %v1468, %v1500
  %v1503 = vlaneseq
  %vm1504 = vcmp.ge.s32.totalorder %v1503, 0
  %vm1505 = vcmp.lt.s32.totalorder %v1503, 256
  %vm1506 = vmand %vm1504, %vm1505
  %1507 = vst.msk [vmem:[#allocation2] sm:$0x3] %vm1506, %v1501
  %v1508 = vld [vmem:[#allocation3] sm:$0x3]
  %v1509 = vperm.slane %v1508, 0
  %v1510 = vperm.slane %v1508, 1
  %v1511 = vlaneseq
  %v1512 = vshrl.u32 %v1511, 7
  %1514 = vset.pattern.permute.xlu0 %v1512
  %1515 = vperm.xlu0 %1514, %v1509
  %v1516 = vpop.permute.xlu0 %1515
  %v1517 = vlaneseq
  %v1518 = vshrl.u32 %v1517, 7
  %v1519 = vadd.s32 %v1518, 8
  %1520 = vset.pattern.permute.xlu0 %v1519
  %1521 = vperm.xlu0 %1520, %v1509
  %v1522 = vpop.permute.xlu0 %1521
  %v1523 = vlaneseq
  %v1524 = vshrl.u32 %v1523, 7
  %v1525 = vadd.s32 %v1524, 16
  %1526 = vset.pattern.permute.xlu0 %v1525
  %1527 = vperm.xlu0 %1526, %v1509
  %v1528 = vpop.permute.xlu0 %1527
  %v1529 = vlaneseq
  %v1530 = vshrl.u32 %v1529, 7
  %v1531 = vadd.s32 %v1530, 24
  %1532 = vset.pattern.permute.xlu0 %v1531
  %1533 = vperm.xlu0 %1532, %v1509
  %v1534 = vpop.permute.xlu0 %1533
  %v1535 = vlaneseq
  %v1536 = vshrl.u32 %v1535, 7
  %v1537 = vadd.s32 %v1536, 32
  %1538 = vset.pattern.permute.xlu0 %v1537
  %1539 = vperm.xlu0 %1538, %v1509
  %v1540 = vpop.permute.xlu0 %1539
  %v1541 = vlaneseq
  %v1542 = vshrl.u32 %v1541, 7
  %v1543 = vadd.s32 %v1542, 40
  %1544 = vset.pattern.permute.xlu0 %v1543
  %1545 = vperm.xlu0 %1544, %v1509
  %v1546 = vpop.permute.xlu0 %1545
  %v1547 = vlaneseq
  %v1548 = vshrl.u32 %v1547, 7
  %v1549 = vadd.s32 %v1548, 48
  %1550 = vset.pattern.permute.xlu0 %v1549
  %1551 = vperm.xlu0 %1550, %v1509
  %v1552 = vpop.permute.xlu0 %1551
  %v1553 = vlaneseq
  %v1554 = vshrl.u32 %v1553, 7
  %v1555 = vadd.s32 %v1554, 56
  %1556 = vset.pattern.permute.xlu0 %v1555
  %1557 = vperm.xlu0 %1556, %v1509
  %v1558 = vpop.permute.xlu0 %1557
  %v1559 = vlaneseq
  %v1560 = vshrl.u32 %v1559, 7
  %v1561 = vadd.s32 %v1560, 64
  %1562 = vset.pattern.permute.xlu0 %v1561
  %1563 = vperm.xlu0 %1562, %v1509
  %v1564 = vpop.permute.xlu0 %1563
  %v1565 = vlaneseq
  %v1566 = vshrl.u32 %v1565, 7
  %v1567 = vadd.s32 %v1566, 72
  %1568 = vset.pattern.permute.xlu0 %v1567
  %1569 = vperm.xlu0 %1568, %v1509
  %v1570 = vpop.permute.xlu0 %1569
  %v1571 = vlaneseq
  %v1572 = vshrl.u32 %v1571, 7
  %v1573 = vadd.s32 %v1572, 80
  %1574 = vset.pattern.permute.xlu0 %v1573
  %1575 = vperm.xlu0 %1574, %v1509
  %v1576 = vpop.permute.xlu0 %1575
  %v1577 = vlaneseq
  %v1578 = vshrl.u32 %v1577, 7
  %v1579 = vadd.s32 %v1578, 88
  %1580 = vset.pattern.permute.xlu0 %v1579
  %1581 = vperm.xlu0 %1580, %v1509
  %v1582 = vpop.permute.xlu0 %1581
  %v1583 = vlaneseq
  %v1584 = vshrl.u32 %v1583, 7
  %v1585 = vadd.s32 %v1584, 96
  %1586 = vset.pattern.permute.xlu0 %v1585
  %1587 = vperm.xlu0 %1586, %v1509
  %v1588 = vpop.permute.xlu0 %1587
  %v1589 = vlaneseq
  %v1590 = vshrl.u32 %v1589, 7
  %v1591 = vadd.s32 %v1590, 104
  %1592 = vset.pattern.permute.xlu0 %v1591
  %1593 = vperm.xlu0 %1592, %v1509
  %v1594 = vpop.permute.xlu0 %1593
  %v1595 = vlaneseq
  %v1596 = vshrl.u32 %v1595, 7
  %v1597 = vadd.s32 %v1596, 112
  %1598 = vset.pattern.permute.xlu0 %v1597
  %1599 = vperm.xlu0 %1598, %v1509
  %v1600 = vpop.permute.xlu0 %1599
  %v1601 = vlaneseq
  %v1602 = vshrl.u32 %v1601, 7
  %v1603 = vadd.s32 %v1602, 120
  %1604 = vset.pattern.permute.xlu0 %v1603
  %1605 = vperm.xlu0 %1604, %v1509
  %v1606 = vpop.permute.xlu0 %1605
  %v1607 = vlaneseq
  %v1608 = vshrl.u32 %v1607, 7
  %1610 = vset.pattern.permute.xlu0 %v1608
  %1611 = vperm.xlu0 %1610, %v1510
  %v1612 = vpop.permute.xlu0 %1611
  %v1613 = vlaneseq
  %v1614 = vshrl.u32 %v1613, 7
  %v1615 = vadd.s32 %v1614, 8
  %1616 = vset.pattern.permute.xlu0 %v1615
  %1617 = vperm.xlu0 %1616, %v1510
  %v1618 = vpop.permute.xlu0 %1617
  %v1619 = vlaneseq
  %v1620 = vshrl.u32 %v1619, 7
  %v1621 = vadd.s32 %v1620, 16
  %1622 = vset.pattern.permute.xlu0 %v1621
  %1623 = vperm.xlu0 %1622, %v1510
  %v1624 = vpop.permute.xlu0 %1623
  %v1625 = vlaneseq
  %v1626 = vshrl.u32 %v1625, 7
  %v1627 = vadd.s32 %v1626, 24
  %1628 = vset.pattern.permute.xlu0 %v1627
  %1629 = vperm.xlu0 %1628, %v1510
  %v1630 = vpop.permute.xlu0 %1629
  %v1631 = vlaneseq
  %v1632 = vshrl.u32 %v1631, 7
  %v1633 = vadd.s32 %v1632, 32
  %1634 = vset.pattern.permute.xlu0 %v1633
  %1635 = vperm.xlu0 %1634, %v1510
  %v1636 = vpop.permute.xlu0 %1635
  %v1637 = vlaneseq
  %v1638 = vshrl.u32 %v1637, 7
  %v1639 = vadd.s32 %v1638, 40
  %1640 = vset.pattern.permute.xlu0 %v1639
  %1641 = vperm.xlu0 %1640, %v1510
  %v1642 = vpop.permute.xlu0 %1641
  %v1643 = vlaneseq
  %v1644 = vshrl.u32 %v1643, 7
  %v1645 = vadd.s32 %v1644, 48
  %1646 = vset.pattern.permute.xlu0 %v1645
  %1647 = vperm.xlu0 %1646, %v1510
  %v1648 = vpop.permute.xlu0 %1647
  %v1649 = vlaneseq
  %v1650 = vshrl.u32 %v1649, 7
  %v1651 = vadd.s32 %v1650, 56
  %1652 = vset.pattern.permute.xlu0 %v1651
  %1653 = vperm.xlu0 %1652, %v1510
  %v1654 = vpop.permute.xlu0 %1653
  %v1655 = vlaneseq
  %v1656 = vshrl.u32 %v1655, 7
  %v1657 = vadd.s32 %v1656, 64
  %1658 = vset.pattern.permute.xlu0 %v1657
  %1659 = vperm.xlu0 %1658, %v1510
  %v1660 = vpop.permute.xlu0 %1659
  %v1661 = vlaneseq
  %v1662 = vshrl.u32 %v1661, 7
  %v1663 = vadd.s32 %v1662, 72
  %1664 = vset.pattern.permute.xlu0 %v1663
  %1665 = vperm.xlu0 %1664, %v1510
  %v1666 = vpop.permute.xlu0 %1665
  %v1667 = vlaneseq
  %v1668 = vshrl.u32 %v1667, 7
  %v1669 = vadd.s32 %v1668, 80
  %1670 = vset.pattern.permute.xlu0 %v1669
  %1671 = vperm.xlu0 %1670, %v1510
  %v1672 = vpop.permute.xlu0 %1671
  %v1673 = vlaneseq
  %v1674 = vshrl.u32 %v1673, 7
  %v1675 = vadd.s32 %v1674, 88
  %1676 = vset.pattern.permute.xlu0 %v1675
  %1677 = vperm.xlu0 %1676, %v1510
  %v1678 = vpop.permute.xlu0 %1677
  %v1679 = vlaneseq
  %v1680 = vshrl.u32 %v1679, 7
  %v1681 = vadd.s32 %v1680, 96
  %1682 = vset.pattern.permute.xlu0 %v1681
  %1683 = vperm.xlu0 %1682, %v1510
  %v1684 = vpop.permute.xlu0 %1683
  %v1685 = vlaneseq
  %v1686 = vshrl.u32 %v1685, 7
  %v1687 = vadd.s32 %v1686, 104
  %1688 = vset.pattern.permute.xlu0 %v1687
  %1689 = vperm.xlu0 %1688, %v1510
  %v1690 = vpop.permute.xlu0 %1689
  %v1691 = vlaneseq
  %v1692 = vshrl.u32 %v1691, 7
  %v1693 = vadd.s32 %v1692, 112
  %1694 = vset.pattern.permute.xlu0 %v1693
  %1695 = vperm.xlu0 %1694, %v1510
  %v1696 = vpop.permute.xlu0 %1695
  %v1697 = vlaneseq
  %v1698 = vshrl.u32 %v1697, 7
  %v1699 = vadd.s32 %v1698, 120
  %1700 = vset.pattern.permute.xlu0 %v1699
  %1701 = vperm.xlu0 %1700, %v1510
  %v1702 = vpop.permute.xlu0 %1701
  %v1703 = vsel %vm695, %v435, %v1516
  %v1704 = vsel %vm696, %v436, %v1522
  %v1705 = vsel %vm697, %v437, %v1528
  %v1706 = vsel %vm698, %v438, %v1534
  %v1707 = vsel %vm699, %v439, %v1540
  %v1708 = vsel %vm700, %v440, %v1546
  %v1709 = vsel %vm701, %v441, %v1552
  %v1710 = vsel %vm702, %v442, %v1558
  %v1711 = vsel %vm703, %v443, %v1564
  %v1712 = vsel %vm704, %v444, %v1570
  %v1713 = vsel %vm705, %v445, %v1576
  %v1714 = vsel %vm706, %v446, %v1582
  %v1715 = vsel %vm707, %v447, %v1588
  %v1716 = vsel %vm708, %v448, %v1594
  %v1717 = vsel %vm709, %v449, %v1600
  %v1718 = vsel %vm710, %v450, %v1606
  %v1719 = vsel %vm711, %v451, %v1612
  %v1720 = vsel %vm712, %v452, %v1618
  %v1721 = vsel %vm713, %v453, %v1624
  %v1722 = vsel %vm714, %v454, %v1630
  %v1723 = vsel %vm715, %v455, %v1636
  %v1724 = vsel %vm716, %v456, %v1642
  %v1725 = vsel %vm717, %v457, %v1648
  %v1726 = vsel %vm718, %v458, %v1654
  %v1727 = vsel %vm719, %v459, %v1660
  %v1728 = vsel %vm720, %v460, %v1666
  %v1729 = vsel %vm721, %v461, %v1672
  %v1730 = vsel %vm722, %v462, %v1678
  %v1731 = vsel %vm723, %v463, %v1684
  %v1732 = vsel %vm724, %v464, %v1690
  %v1733 = vsel %vm725, %v465, %v1696
  %v1734 = vsel %vm726, %v466, %v1702
  %v1735 = vrot.slane %v1703, 1
  %v1736 = vrot.slane %v1703, 2
  %v1737 = vrot.slane %v1703, 3
  %v1738 = vrot.slane %v1703, 4
  %v1739 = vrot.slane %v1703, 5
  %v1740 = vrot.slane %v1703, 6
  %v1741 = vrot.slane %v1703, 7
  %v1742 = vrot.slane %v1704, 1
  %v1743 = vrot.slane %v1704, 2
  %v1744 = vrot.slane %v1704, 3
  %v1745 = vrot.slane %v1704, 4
  %v1746 = vrot.slane %v1704, 5
  %v1747 = vrot.slane %v1704, 6
  %v1748 = vrot.slane %v1704, 7
  %v1749 = vrot.slane %v1705, 1
  %v1750 = vrot.slane %v1705, 2
  %v1751 = vrot.slane %v1705, 3
  %v1752 = vrot.slane %v1705, 4
  %v1753 = vrot.slane %v1705, 5
  %v1754 = vrot.slane %v1705, 6
  %v1755 = vrot.slane %v1705, 7
  %v1756 = vrot.slane %v1706, 1
  %v1757 = vrot.slane %v1706, 2
  %v1758 = vrot.slane %v1706, 3
  %v1759 = vrot.slane %v1706, 4
  %v1760 = vrot.slane %v1706, 5
  %v1761 = vrot.slane %v1706, 6
  %v1762 = vrot.slane %v1706, 7
  %v1763 = vrot.slane %v1707, 1
  %v1764 = vrot.slane %v1707, 2
  %v1765 = vrot.slane %v1707, 3
  %v1766 = vrot.slane %v1707, 4
  %v1767 = vrot.slane %v1707, 5
  %v1768 = vrot.slane %v1707, 6
  %v1769 = vrot.slane %v1707, 7
  %v1770 = vrot.slane %v1708, 1
  %v1771 = vrot.slane %v1708, 2
  %v1772 = vrot.slane %v1708, 3
  %v1773 = vrot.slane %v1708, 4
  %v1774 = vrot.slane %v1708, 5
  %v1775 = vrot.slane %v1708, 6
  %v1776 = vrot.slane %v1708, 7
  %v1777 = vrot.slane %v1709, 1
  %v1778 = vrot.slane %v1709, 2
  %v1779 = vrot.slane %v1709, 3
  %v1780 = vrot.slane %v1709, 4
  %v1781 = vrot.slane %v1709, 5
  %v1782 = vrot.slane %v1709, 6
  %v1783 = vrot.slane %v1709, 7
  %v1784 = vrot.slane %v1710, 1
  %v1785 = vrot.slane %v1710, 2
  %v1786 = vrot.slane %v1710, 3
  %v1787 = vrot.slane %v1710, 4
  %v1788 = vrot.slane %v1710, 5
  %v1789 = vrot.slane %v1710, 6
  %v1790 = vrot.slane %v1710, 7
  %v1791 = vrot.slane %v1711, 1
  %v1792 = vrot.slane %v1711, 2
  %v1793 = vrot.slane %v1711, 3
  %v1794 = vrot.slane %v1711, 4
  %v1795 = vrot.slane %v1711, 5
  %v1796 = vrot.slane %v1711, 6
  %v1797 = vrot.slane %v1711, 7
  %v1798 = vrot.slane %v1712, 1
  %v1799 = vrot.slane %v1712, 2
  %v1800 = vrot.slane %v1712, 3
  %v1801 = vrot.slane %v1712, 4
  %v1802 = vrot.slane %v1712, 5
  %v1803 = vrot.slane %v1712, 6
  %v1804 = vrot.slane %v1712, 7
  %v1805 = vrot.slane %v1713, 1
  %v1806 = vrot.slane %v1713, 2
  %v1807 = vrot.slane %v1713, 3
  %v1808 = vrot.slane %v1713, 4
  %v1809 = vrot.slane %v1713, 5
  %v1810 = vrot.slane %v1713, 6
  %v1811 = vrot.slane %v1713, 7
  %v1812 = vrot.slane %v1714, 1
  %v1813 = vrot.slane %v1714, 2
  %v1814 = vrot.slane %v1714, 3
  %v1815 = vrot.slane %v1714, 4
  %v1816 = vrot.slane %v1714, 5
  %v1817 = vrot.slane %v1714, 6
  %v1818 = vrot.slane %v1714, 7
  %v1819 = vrot.slane %v1715, 1
  %v1820 = vrot.slane %v1715, 2
  %v1821 = vrot.slane %v1715, 3
  %v1822 = vrot.slane %v1715, 4
  %v1823 = vrot.slane %v1715, 5
  %v1824 = vrot.slane %v1715, 6
  %v1825 = vrot.slane %v1715, 7
  %v1826 = vrot.slane %v1716, 1
  %v1827 = vrot.slane %v1716, 2
  %v1828 = vrot.slane %v1716, 3
  %v1829 = vrot.slane %v1716, 4
  %v1830 = vrot.slane %v1716, 5
  %v1831 = vrot.slane %v1716, 6
  %v1832 = vrot.slane %v1716, 7
  %v1833 = vrot.slane %v1717, 1
  %v1834 = vrot.slane %v1717, 2
  %v1835 = vrot.slane %v1717, 3
  %v1836 = vrot.slane %v1717, 4
  %v1837 = vrot.slane %v1717, 5
  %v1838 = vrot.slane %v1717, 6
  %v1839 = vrot.slane %v1717, 7
  %v1840 = vrot.slane %v1718, 1
  %v1841 = vrot.slane %v1718, 2
  %v1842 = vrot.slane %v1718, 3
  %v1843 = vrot.slane %v1718, 4
  %v1844 = vrot.slane %v1718, 5
  %v1845 = vrot.slane %v1718, 6
  %v1846 = vrot.slane %v1718, 7
  %v1847 = vrot.slane %v1719, 1
  %v1848 = vrot.slane %v1719, 2
  %v1849 = vrot.slane %v1719, 3
  %v1850 = vrot.slane %v1719, 4
  %v1851 = vrot.slane %v1719, 5
  %v1852 = vrot.slane %v1719, 6
  %v1853 = vrot.slane %v1719, 7
  %v1854 = vrot.slane %v1720, 1
  %v1855 = vrot.slane %v1720, 2
  %v1856 = vrot.slane %v1720, 3
  %v1857 = vrot.slane %v1720, 4
  %v1858 = vrot.slane %v1720, 5
  %v1859 = vrot.slane %v1720, 6
  %v1860 = vrot.slane %v1720, 7
  %v1861 = vrot.slane %v1721, 1
  %v1862 = vrot.slane %v1721, 2
  %v1863 = vrot.slane %v1721, 3
  %v1864 = vrot.slane %v1721, 4
  %v1865 = vrot.slane %v1721, 5
  %v1866 = vrot.slane %v1721, 6
  %v1867 = vrot.slane %v1721, 7
  %v1868 = vrot.slane %v1722, 1
  %v1869 = vrot.slane %v1722, 2
  %v1870 = vrot.slane %v1722, 3
  %v1871 = vrot.slane %v1722, 4
  %v1872 = vrot.slane %v1722, 5
  %v1873 = vrot.slane %v1722, 6
  %v1874 = vrot.slane %v1722, 7
  %v1875 = vrot.slane %v1723, 1
  %v1876 = vrot.slane %v1723, 2
  %v1877 = vrot.slane %v1723, 3
  %v1878 = vrot.slane %v1723, 4
  %v1879 = vrot.slane %v1723, 5
  %v1880 = vrot.slane %v1723, 6
  %v1881 = vrot.slane %v1723, 7
  %v1882 = vrot.slane %v1724, 1
  %v1883 = vrot.slane %v1724, 2
  %v1884 = vrot.slane %v1724, 3
  %v1885 = vrot.slane %v1724, 4
  %v1886 = vrot.slane %v1724, 5
  %v1887 = vrot.slane %v1724, 6
  %v1888 = vrot.slane %v1724, 7
  %v1889 = vrot.slane %v1725, 1
  %v1890 = vrot.slane %v1725, 2
  %v1891 = vrot.slane %v1725, 3
  %v1892 = vrot.slane %v1725, 4
  %v1893 = vrot.slane %v1725, 5
  %v1894 = vrot.slane %v1725, 6
  %v1895 = vrot.slane %v1725, 7
  %v1896 = vrot.slane %v1726, 1
  %v1897 = vrot.slane %v1726, 2
  %v1898 = vrot.slane %v1726, 3
  %v1899 = vrot.slane %v1726, 4
  %v1900 = vrot.slane %v1726, 5
  %v1901 = vrot.slane %v1726, 6
  %v1902 = vrot.slane %v1726, 7
  %v1903 = vrot.slane %v1727, 1
  %v1904 = vrot.slane %v1727, 2
  %v1905 = vrot.slane %v1727, 3
  %v1906 = vrot.slane %v1727, 4
  %v1907 = vrot.slane %v1727, 5
  %v1908 = vrot.slane %v1727, 6
  %v1909 = vrot.slane %v1727, 7
  %v1910 = vrot.slane %v1728, 1
  %v1911 = vrot.slane %v1728, 2
  %v1912 = vrot.slane %v1728, 3
  %v1913 = vrot.slane %v1728, 4
  %v1914 = vrot.slane %v1728, 5
  %v1915 = vrot.slane %v1728, 6
  %v1916 = vrot.slane %v1728, 7
  %v1917 = vrot.slane %v1729, 1
  %v1918 = vrot.slane %v1729, 2
  %v1919 = vrot.slane %v1729, 3
  %v1920 = vrot.slane %v1729, 4
  %v1921 = vrot.slane %v1729, 5
  %v1922 = vrot.slane %v1729, 6
  %v1923 = vrot.slane %v1729, 7
  %v1924 = vrot.slane %v1730, 1
  %v1925 = vrot.slane %v1730, 2
  %v1926 = vrot.slane %v1730, 3
  %v1927 = vrot.slane %v1730, 4
  %v1928 = vrot.slane %v1730, 5
  %v1929 = vrot.slane %v1730, 6
  %v1930 = vrot.slane %v1730, 7
  %v1931 = vrot.slane %v1731, 1
  %v1932 = vrot.slane %v1731, 2
  %v1933 = vrot.slane %v1731, 3
  %v1934 = vrot.slane %v1731, 4
  %v1935 = vrot.slane %v1731, 5
  %v1936 = vrot.slane %v1731, 6
  %v1937 = vrot.slane %v1731, 7
  %v1938 = vrot.slane %v1732, 1
  %v1939 = vrot.slane %v1732, 2
  %v1940 = vrot.slane %v1732, 3
  %v1941 = vrot.slane %v1732, 4
  %v1942 = vrot.slane %v1732, 5
  %v1943 = vrot.slane %v1732, 6
  %v1944 = vrot.slane %v1732, 7
  %v1945 = vrot.slane %v1733, 1
  %v1946 = vrot.slane %v1733, 2
  %v1947 = vrot.slane %v1733, 3
  %v1948 = vrot.slane %v1733, 4
  %v1949 = vrot.slane %v1733, 5
  %v1950 = vrot.slane %v1733, 6
  %v1951 = vrot.slane %v1733, 7
  %v1952 = vrot.slane %v1734, 1
  %v1953 = vrot.slane %v1734, 2
  %v1954 = vrot.slane %v1734, 3
  %v1955 = vrot.slane %v1734, 4
  %v1956 = vrot.slane %v1734, 5
  %v1957 = vrot.slane %v1734, 6
  %v1958 = vrot.slane %v1734, 7
  %1959 = vst [vmem:[#allocation1] ss:$9 sm:$0xff] %v1703
  %s1960 = scalar_lea.vmem [#allocation1], 1
  %1961 = vst [vmem:[%s1960] ss:$9 sm:$0xff] %v1735
  %s1962 = scalar_lea.vmem [#allocation1], 2
  %1963 = vst [vmem:[%s1962] ss:$9 sm:$0xff] %v1736
  %s1964 = scalar_lea.vmem [#allocation1], 3
  %1965 = vst [vmem:[%s1964] ss:$9 sm:$0xff] %v1737
  %s1966 = scalar_lea.vmem [#allocation1], 4
  %1967 = vst [vmem:[%s1966] ss:$9 sm:$0xff] %v1738
  %s1968 = scalar_lea.vmem [#allocation1], 5
  %1969 = vst [vmem:[%s1968] ss:$9 sm:$0xff] %v1739
  %s1970 = scalar_lea.vmem [#allocation1], 6
  %1971 = vst [vmem:[%s1970] ss:$9 sm:$0xff] %v1740
  %s1972 = scalar_lea.vmem [#allocation1], 7
  %1973 = vst [vmem:[%s1972] ss:$9 sm:$0xff] %v1741
  %v1974 = vld [vmem:[#allocation1] sm:$0xff]
  %1975 = vst [vmem:[#allocation1] ss:$9 sm:$0xff] %v1704
  %1976 = vst [vmem:[%s1960] ss:$9 sm:$0xff] %v1742
  %1977 = vst [vmem:[%s1962] ss:$9 sm:$0xff] %v1743
  %1978 = vst [vmem:[%s1964] ss:$9 sm:$0xff] %v1744
  %1979 = vst [vmem:[%s1966] ss:$9 sm:$0xff] %v1745
  %1980 = vst [vmem:[%s1968] ss:$9 sm:$0xff] %v1746
  %1981 = vst [vmem:[%s1970] ss:$9 sm:$0xff] %v1747
  %1982 = vst [vmem:[%s1972] ss:$9 sm:$0xff] %v1748
  %v1983 = vld [vmem:[#allocation1] sm:$0xff]
  %1984 = vst [vmem:[#allocation1] ss:$9 sm:$0xff] %v1705
  %1985 = vst [vmem:[%s1960] ss:$9 sm:$0xff] %v1749
  %1986 = vst [vmem:[%s1962] ss:$9 sm:$0xff] %v1750
  %1987 = vst [vmem:[%s1964] ss:$9 sm:$0xff] %v1751
  %1988 = vst [vmem:[%s1966] ss:$9 sm:$0xff] %v1752
  %1989 = vst [vmem:[%s1968] ss:$9 sm:$0xff] %v1753
  %1990 = vst [vmem:[%s1970] ss:$9 sm:$0xff] %v1754
  %1991 = vst [vmem:[%s1972] ss:$9 sm:$0xff] %v1755
  %v1992 = vld [vmem:[#allocation1] sm:$0xff]
  %1993 = vst [vmem:[#allocation1] ss:$9 sm:$0xff] %v1706
  %1994 = vst [vmem:[%s1960] ss:$9 sm:$0xff] %v1756
  %1995 = vst [vmem:[%s1962] ss:$9 sm:$0xff] %v1757
  %1996 = vst [vmem:[%s1964] ss:$9 sm:$0xff] %v1758
  %1997 = vst [vmem:[%s1966] ss:$9 sm:$0xff] %v1759
  %1998 = vst [vmem:[%s1968] ss:$9 sm:$0xff] %v1760
  %1999 = vst [vmem:[%s1970] ss:$9 sm:$0xff] %v1761
  %2000 = vst [vmem:[%s1972] ss:$9 sm:$0xff] %v1762
  %v2001 = vld [vmem:[#allocation1] sm:$0xff]
  %2002 = vst [vmem:[#allocation1] ss:$9 sm:$0xff] %v1707
  %2003 = vst [vmem:[%s1960] ss:$9 sm:$0xff] %v1763
  %2004 = vst [vmem:[%s1962] ss:$9 sm:$0xff] %v1764
  %2005 = vst [vmem:[%s1964] ss:$9 sm:$0xff] %v1765
  %2006 = vst [vmem:[%s1966] ss:$9 sm:$0xff] %v1766
  %2007 = vst [vmem:[%s1968] ss:$9 sm:$0xff] %v1767
  %2008 = vst [vmem:[%s1970] ss:$9 sm:$0xff] %v1768
  %2009 = vst [vmem:[%s1972] ss:$9 sm:$0xff] %v1769
  %v2010 = vld [vmem:[#allocation1] sm:$0xff]
  %2011 = vst [vmem:[#allocation1] ss:$9 sm:$0xff] %v1708
  %2012 = vst [vmem:[%s1960] ss:$9 sm:$0xff] %v1770
  %2013 = vst [vmem:[%s1962] ss:$9 sm:$0xff] %v1771
  %2014 = vst [vmem:[%s1964] ss:$9 sm:$0xff] %v1772
  %2015 = vst [vmem:[%s1966] ss:$9 sm:$0xff] %v1773
  %2016 = vst [vmem:[%s1968] ss:$9 sm:$0xff] %v1774
  %2017 = vst [vmem:[%s1970] ss:$9 sm:$0xff] %v1775
  %2018 = vst [vmem:[%s1972] ss:$9 sm:$0xff] %v1776
  %v2019 = vld [vmem:[#allocation1] sm:$0xff]
  %2020 = vst [vmem:[#allocation1] ss:$9 sm:$0xff] %v1709
  %2021 = vst [vmem:[%s1960] ss:$9 sm:$0xff] %v1777
  %2022 = vst [vmem:[%s1962] ss:$9 sm:$0xff] %v1778
  %2023 = vst [vmem:[%s1964] ss:$9 sm:$0xff] %v1779
  %2024 = vst [vmem:[%s1966] ss:$9 sm:$0xff] %v1780
  %2025 = vst [vmem:[%s1968] ss:$9 sm:$0xff] %v1781
  %2026 = vst [vmem:[%s1970] ss:$9 sm:$0xff] %v1782
  %2027 = vst [vmem:[%s1972] ss:$9 sm:$0xff] %v1783
  %v2028 = vld [vmem:[#allocation1] sm:$0xff]
  %2029 = vst [vmem:[#allocation1] ss:$9 sm:$0xff] %v1710
  %2030 = vst [vmem:[%s1960] ss:$9 sm:$0xff] %v1784
  %2031 = vst [vmem:[%s1962] ss:$9 sm:$0xff] %v1785
  %2032 = vst [vmem:[%s1964] ss:$9 sm:$0xff] %v1786
  %2033 = vst [vmem:[%s1966] ss:$9 sm:$0xff] %v1787
  %2034 = vst [vmem:[%s1968] ss:$9 sm:$0xff] %v1788
  %2035 = vst [vmem:[%s1970] ss:$9 sm:$0xff] %v1789
  %2036 = vst [vmem:[%s1972] ss:$9 sm:$0xff] %v1790
  %v2037 = vld [vmem:[#allocation1] sm:$0xff]
  %2038 = vst [vmem:[#allocation1] ss:$9 sm:$0xff] %v1711
  %2039 = vst [vmem:[%s1960] ss:$9 sm:$0xff] %v1791
  %2040 = vst [vmem:[%s1962] ss:$9 sm:$0xff] %v1792
  %2041 = vst [vmem:[%s1964] ss:$9 sm:$0xff] %v1793
  %2042 = vst [vmem:[%s1966] ss:$9 sm:$0xff] %v1794
  %2043 = vst [vmem:[%s1968] ss:$9 sm:$0xff] %v1795
  %2044 = vst [vmem:[%s1970] ss:$9 sm:$0xff] %v1796
  %2045 = vst [vmem:[%s1972] ss:$9 sm:$0xff] %v1797
  %v2046 = vld [vmem:[#allocation1] sm:$0xff]
  %2047 = vst [vmem:[#allocation1] ss:$9 sm:$0xff] %v1712
  %2048 = vst [vmem:[%s1960] ss:$9 sm:$0xff] %v1798
  %2049 = vst [vmem:[%s1962] ss:$9 sm:$0xff] %v1799
  %2050 = vst [vmem:[%s1964] ss:$9 sm:$0xff] %v1800
  %2051 = vst [vmem:[%s1966] ss:$9 sm:$0xff] %v1801
  %2052 = vst [vmem:[%s1968] ss:$9 sm:$0xff] %v1802
  %2053 = vst [vmem:[%s1970] ss:$9 sm:$0xff] %v1803
  %2054 = vst [vmem:[%s1972] ss:$9 sm:$0xff] %v1804
  %v2055 = vld [vmem:[#allocation1] sm:$0xff]
  %2056 = vst [vmem:[#allocation1] ss:$9 sm:$0xff] %v1713
  %2057 = vst [vmem:[%s1960] ss:$9 sm:$0xff] %v1805
  %2058 = vst [vmem:[%s1962] ss:$9 sm:$0xff] %v1806
  %2059 = vst [vmem:[%s1964] ss:$9 sm:$0xff] %v1807
  %2060 = vst [vmem:[%s1966] ss:$9 sm:$0xff] %v1808
  %2061 = vst [vmem:[%s1968] ss:$9 sm:$0xff] %v1809
  %2062 = vst [vmem:[%s1970] ss:$9 sm:$0xff] %v1810
  %2063 = vst [vmem:[%s1972] ss:$9 sm:$0xff] %v1811
  %v2064 = vld [vmem:[#allocation1] sm:$0xff]
  %2065 = vst [vmem:[#allocation1] ss:$9 sm:$0xff] %v1714
  %2066 = vst [vmem:[%s1960] ss:$9 sm:$0xff] %v1812
  %2067 = vst [vmem:[%s1962] ss:$9 sm:$0xff] %v1813
  %2068 = vst [vmem:[%s1964] ss:$9 sm:$0xff] %v1814
  %2069 = vst [vmem:[%s1966] ss:$9 sm:$0xff] %v1815
  %2070 = vst [vmem:[%s1968] ss:$9 sm:$0xff] %v1816
  %2071 = vst [vmem:[%s1970] ss:$9 sm:$0xff] %v1817
  %2072 = vst [vmem:[%s1972] ss:$9 sm:$0xff] %v1818
  %v2073 = vld [vmem:[#allocation1] sm:$0xff]
  %2074 = vst [vmem:[#allocation1] ss:$9 sm:$0xff] %v1715
  %2075 = vst [vmem:[%s1960] ss:$9 sm:$0xff] %v1819
  %2076 = vst [vmem:[%s1962] ss:$9 sm:$0xff] %v1820
  %2077 = vst [vmem:[%s1964] ss:$9 sm:$0xff] %v1821
  %2078 = vst [vmem:[%s1966] ss:$9 sm:$0xff] %v1822
  %2079 = vst [vmem:[%s1968] ss:$9 sm:$0xff] %v1823
  %2080 = vst [vmem:[%s1970] ss:$9 sm:$0xff] %v1824
  %2081 = vst [vmem:[%s1972] ss:$9 sm:$0xff] %v1825
  %v2082 = vld [vmem:[#allocation1] sm:$0xff]
  %2083 = vst [vmem:[#allocation1] ss:$9 sm:$0xff] %v1716
  %2084 = vst [vmem:[%s1960] ss:$9 sm:$0xff] %v1826
  %2085 = vst [vmem:[%s1962] ss:$9 sm:$0xff] %v1827
  %2086 = vst [vmem:[%s1964] ss:$9 sm:$0xff] %v1828
  %2087 = vst [vmem:[%s1966] ss:$9 sm:$0xff] %v1829
  %2088 = vst [vmem:[%s1968] ss:$9 sm:$0xff] %v1830
  %2089 = vst [vmem:[%s1970] ss:$9 sm:$0xff] %v1831
  %2090 = vst [vmem:[%s1972] ss:$9 sm:$0xff] %v1832
  %v2091 = vld [vmem:[#allocation1] sm:$0xff]
  %2092 = vst [vmem:[#allocation1] ss:$9 sm:$0xff] %v1717
  %2093 = vst [vmem:[%s1960] ss:$9 sm:$0xff] %v1833
  %2094 = vst [vmem:[%s1962] ss:$9 sm:$0xff] %v1834
  %2095 = vst [vmem:[%s1964] ss:$9 sm:$0xff] %v1835
  %2096 = vst [vmem:[%s1966] ss:$9 sm:$0xff] %v1836
  %2097 = vst [vmem:[%s1968] ss:$9 sm:$0xff] %v1837
  %2098 = vst [vmem:[%s1970] ss:$9 sm:$0xff] %v1838
  %2099 = vst [vmem:[%s1972] ss:$9 sm:$0xff] %v1839
  %v2100 = vld [vmem:[#allocation1] sm:$0xff]
  %2101 = vst [vmem:[#allocation1] ss:$9 sm:$0xff] %v1718
  %2102 = vst [vmem:[%s1960] ss:$9 sm:$0xff] %v1840
  %2103 = vst [vmem:[%s1962] ss:$9 sm:$0xff] %v1841
  %2104 = vst [vmem:[%s1964] ss:$9 sm:$0xff] %v1842
  %2105 = vst [vmem:[%s1966] ss:$9 sm:$0xff] %v1843
  %2106 = vst [vmem:[%s1968] ss:$9 sm:$0xff] %v1844
  %2107 = vst [vmem:[%s1970] ss:$9 sm:$0xff] %v1845
  %2108 = vst [vmem:[%s1972] ss:$9 sm:$0xff] %v1846
  %v2109 = vld [vmem:[#allocation1] sm:$0xff]
  %2110 = vst [vmem:[#allocation1] ss:$9 sm:$0xff] %v1719
  %2111 = vst [vmem:[%s1960] ss:$9 sm:$0xff] %v1847
  %2112 = vst [vmem:[%s1962] ss:$9 sm:$0xff] %v1848
  %2113 = vst [vmem:[%s1964] ss:$9 sm:$0xff] %v1849
  %2114 = vst [vmem:[%s1966] ss:$9 sm:$0xff] %v1850
  %2115 = vst [vmem:[%s1968] ss:$9 sm:$0xff] %v1851
  %2116 = vst [vmem:[%s1970] ss:$9 sm:$0xff] %v1852
  %2117 = vst [vmem:[%s1972] ss:$9 sm:$0xff] %v1853
  %v2118 = vld [vmem:[#allocation1] sm:$0xff]
  %2119 = vst [vmem:[#allocation1] ss:$9 sm:$0xff] %v1720
  %2120 = vst [vmem:[%s1960] ss:$9 sm:$0xff] %v1854
  %2121 = vst [vmem:[%s1962] ss:$9 sm:$0xff] %v1855
  %2122 = vst [vmem:[%s1964] ss:$9 sm:$0xff] %v1856
  %2123 = vst [vmem:[%s1966] ss:$9 sm:$0xff] %v1857
  %2124 = vst [vmem:[%s1968] ss:$9 sm:$0xff] %v1858
  %2125 = vst [vmem:[%s1970] ss:$9 sm:$0xff] %v1859
  %2126 = vst [vmem:[%s1972] ss:$9 sm:$0xff] %v1860
  %v2127 = vld [vmem:[#allocation1] sm:$0xff]
  %2128 = vst [vmem:[#allocation1] ss:$9 sm:$0xff] %v1721
  %2129 = vst [vmem:[%s1960] ss:$9 sm:$0xff] %v1861
  %2130 = vst [vmem:[%s1962] ss:$9 sm:$0xff] %v1862
  %2131 = vst [vmem:[%s1964] ss:$9 sm:$0xff] %v1863
  %2132 = vst [vmem:[%s1966] ss:$9 sm:$0xff] %v1864
  %2133 = vst [vmem:[%s1968] ss:$9 sm:$0xff] %v1865
  %2134 = vst [vmem:[%s1970] ss:$9 sm:$0xff] %v1866
  %2135 = vst [vmem:[%s1972] ss:$9 sm:$0xff] %v1867
  %v2136 = vld [vmem:[#allocation1] sm:$0xff]
  %2137 = vst [vmem:[#allocation1] ss:$9 sm:$0xff] %v1722
  %2138 = vst [vmem:[%s1960] ss:$9 sm:$0xff] %v1868
  %2139 = vst [vmem:[%s1962] ss:$9 sm:$0xff] %v1869
  %2140 = vst [vmem:[%s1964] ss:$9 sm:$0xff] %v1870
  %2141 = vst [vmem:[%s1966] ss:$9 sm:$0xff] %v1871
  %2142 = vst [vmem:[%s1968] ss:$9 sm:$0xff] %v1872
  %2143 = vst [vmem:[%s1970] ss:$9 sm:$0xff] %v1873
  %2144 = vst [vmem:[%s1972] ss:$9 sm:$0xff] %v1874
  %v2145 = vld [vmem:[#allocation1] sm:$0xff]
  %2146 = vst [vmem:[#allocation1] ss:$9 sm:$0xff] %v1723
  %2147 = vst [vmem:[%s1960] ss:$9 sm:$0xff] %v1875
  %2148 = vst [vmem:[%s1962] ss:$9 sm:$0xff] %v1876
  %2149 = vst [vmem:[%s1964] ss:$9 sm:$0xff] %v1877
  %2150 = vst [vmem:[%s1966] ss:$9 sm:$0xff] %v1878
  %2151 = vst [vmem:[%s1968] ss:$9 sm:$0xff] %v1879
  %2152 = vst [vmem:[%s1970] ss:$9 sm:$0xff] %v1880
  %2153 = vst [vmem:[%s1972] ss:$9 sm:$0xff] %v1881
  %v2154 = vld [vmem:[#allocation1] sm:$0xff]
  %2155 = vst [vmem:[#allocation1] ss:$9 sm:$0xff] %v1724
  %2156 = vst [vmem:[%s1960] ss:$9 sm:$0xff] %v1882
  %2157 = vst [vmem:[%s1962] ss:$9 sm:$0xff] %v1883
  %2158 = vst [vmem:[%s1964] ss:$9 sm:$0xff] %v1884
  %2159 = vst [vmem:[%s1966] ss:$9 sm:$0xff] %v1885
  %2160 = vst [vmem:[%s1968] ss:$9 sm:$0xff] %v1886
  %2161 = vst [vmem:[%s1970] ss:$9 sm:$0xff] %v1887
  %2162 = vst [vmem:[%s1972] ss:$9 sm:$0xff] %v1888
  %v2163 = vld [vmem:[#allocation1] sm:$0xff]
  %2164 = vst [vmem:[#allocation1] ss:$9 sm:$0xff] %v1725
  %2165 = vst [vmem:[%s1960] ss:$9 sm:$0xff] %v1889
  %2166 = vst [vmem:[%s1962] ss:$9 sm:$0xff] %v1890
  %2167 = vst [vmem:[%s1964] ss:$9 sm:$0xff] %v1891
  %2168 = vst [vmem:[%s1966] ss:$9 sm:$0xff] %v1892
  %2169 = vst [vmem:[%s1968] ss:$9 sm:$0xff] %v1893
  %2170 = vst [vmem:[%s1970] ss:$9 sm:$0xff] %v1894
  %2171 = vst [vmem:[%s1972] ss:$9 sm:$0xff] %v1895
  %v2172 = vld [vmem:[#allocation1] sm:$0xff]
  %2173 = vst [vmem:[#allocation1] ss:$9 sm:$0xff] %v1726
  %2174 = vst [vmem:[%s1960] ss:$9 sm:$0xff] %v1896
  %2175 = vst [vmem:[%s1962] ss:$9 sm:$0xff] %v1897
  %2176 = vst [vmem:[%s1964] ss:$9 sm:$0xff] %v1898
  %2177 = vst [vmem:[%s1966] ss:$9 sm:$0xff] %v1899
  %2178 = vst [vmem:[%s1968] ss:$9 sm:$0xff] %v1900
  %2179 = vst [vmem:[%s1970] ss:$9 sm:$0xff] %v1901
  %2180 = vst [vmem:[%s1972] ss:$9 sm:$0xff] %v1902
  %v2181 = vld [vmem:[#allocation1] sm:$0xff]
  %2182 = vst [vmem:[#allocation1] ss:$9 sm:$0xff] %v1727
  %2183 = vst [vmem:[%s1960] ss:$9 sm:$0xff] %v1903
  %2184 = vst [vmem:[%s1962] ss:$9 sm:$0xff] %v1904
  %2185 = vst [vmem:[%s1964] ss:$9 sm:$0xff] %v1905
  %2186 = vst [vmem:[%s1966] ss:$9 sm:$0xff] %v1906
  %2187 = vst [vmem:[%s1968] ss:$9 sm:$0xff] %v1907
  %2188 = vst [vmem:[%s1970] ss:$9 sm:$0xff] %v1908
  %2189 = vst [vmem:[%s1972] ss:$9 sm:$0xff] %v1909
  %v2190 = vld [vmem:[#allocation1] sm:$0xff]
  %2191 = vst [vmem:[#allocation1] ss:$9 sm:$0xff] %v1728
  %2192 = vst [vmem:[%s1960] ss:$9 sm:$0xff] %v1910
  %2193 = vst [vmem:[%s1962] ss:$9 sm:$0xff] %v1911
  %2194 = vst [vmem:[%s1964] ss:$9 sm:$0xff] %v1912
  %2195 = vst [vmem:[%s1966] ss:$9 sm:$0xff] %v1913
  %2196 = vst [vmem:[%s1968] ss:$9 sm:$0xff] %v1914
  %2197 = vst [vmem:[%s1970] ss:$9 sm:$0xff] %v1915
  %2198 = vst [vmem:[%s1972] ss:$9 sm:$0xff] %v1916
  %v2199 = vld [vmem:[#allocation1] sm:$0xff]
  %2200 = vst [vmem:[#allocation1] ss:$9 sm:$0xff] %v1729
  %2201 = vst [vmem:[%s1960] ss:$9 sm:$0xff] %v1917
  %2202 = vst [vmem:[%s1962] ss:$9 sm:$0xff] %v1918
  %2203 = vst [vmem:[%s1964] ss:$9 sm:$0xff] %v1919
  %2204 = vst [vmem:[%s1966] ss:$9 sm:$0xff] %v1920
  %2205 = vst [vmem:[%s1968] ss:$9 sm:$0xff] %v1921
  %2206 = vst [vmem:[%s1970] ss:$9 sm:$0xff] %v1922
  %2207 = vst [vmem:[%s1972] ss:$9 sm:$0xff] %v1923
  %v2208 = vld [vmem:[#allocation1] sm:$0xff]
  %2209 = vst [vmem:[#allocation1] ss:$9 sm:$0xff] %v1730
  %2210 = vst [vmem:[%s1960] ss:$9 sm:$0xff] %v1924
  %2211 = vst [vmem:[%s1962] ss:$9 sm:$0xff] %v1925
  %2212 = vst [vmem:[%s1964] ss:$9 sm:$0xff] %v1926
  %2213 = vst [vmem:[%s1966] ss:$9 sm:$0xff] %v1927
  %2214 = vst [vmem:[%s1968] ss:$9 sm:$0xff] %v1928
  %2215 = vst [vmem:[%s1970] ss:$9 sm:$0xff] %v1929
  %2216 = vst [vmem:[%s1972] ss:$9 sm:$0xff] %v1930
  %v2217 = vld [vmem:[#allocation1] sm:$0xff]
  %2218 = vst [vmem:[#allocation1] ss:$9 sm:$0xff] %v1731
  %2219 = vst [vmem:[%s1960] ss:$9 sm:$0xff] %v1931
  %2220 = vst [vmem:[%s1962] ss:$9 sm:$0xff] %v1932
  %2221 = vst [vmem:[%s1964] ss:$9 sm:$0xff] %v1933
  %2222 = vst [vmem:[%s1966] ss:$9 sm:$0xff] %v1934
  %2223 = vst [vmem:[%s1968] ss:$9 sm:$0xff] %v1935
  %2224 = vst [vmem:[%s1970] ss:$9 sm:$0xff] %v1936
  %2225 = vst [vmem:[%s1972] ss:$9 sm:$0xff] %v1937
  %v2226 = vld [vmem:[#allocation1] sm:$0xff]
  %2227 = vst [vmem:[#allocation1] ss:$9 sm:$0xff] %v1732
  %2228 = vst [vmem:[%s1960] ss:$9 sm:$0xff] %v1938
  %2229 = vst [vmem:[%s1962] ss:$9 sm:$0xff] %v1939
  %2230 = vst [vmem:[%s1964] ss:$9 sm:$0xff] %v1940
  %2231 = vst [vmem:[%s1966] ss:$9 sm:$0xff] %v1941
  %2232 = vst [vmem:[%s1968] ss:$9 sm:$0xff] %v1942
  %2233 = vst [vmem:[%s1970] ss:$9 sm:$0xff] %v1943
  %2234 = vst [vmem:[%s1972] ss:$9 sm:$0xff] %v1944
  %v2235 = vld [vmem:[#allocation1] sm:$0xff]
  %2236 = vst [vmem:[#allocation1] ss:$9 sm:$0xff] %v1733
  %2237 = vst [vmem:[%s1960] ss:$9 sm:$0xff] %v1945
  %2238 = vst [vmem:[%s1962] ss:$9 sm:$0xff] %v1946
  %2239 = vst [vmem:[%s1964] ss:$9 sm:$0xff] %v1947
  %2240 = vst [vmem:[%s1966] ss:$9 sm:$0xff] %v1948
  %2241 = vst [vmem:[%s1968] ss:$9 sm:$0xff] %v1949
  %2242 = vst [vmem:[%s1970] ss:$9 sm:$0xff] %v1950
  %2243 = vst [vmem:[%s1972] ss:$9 sm:$0xff] %v1951
  %v2244 = vld [vmem:[#allocation1] sm:$0xff]
  %2245 = vst [vmem:[#allocation1] ss:$9 sm:$0xff] %v1734
  %2246 = vst [vmem:[%s1960] ss:$9 sm:$0xff] %v1952
  %2247 = vst [vmem:[%s1962] ss:$9 sm:$0xff] %v1953
  %2248 = vst [vmem:[%s1964] ss:$9 sm:$0xff] %v1954
  %2249 = vst [vmem:[%s1966] ss:$9 sm:$0xff] %v1955
  %2250 = vst [vmem:[%s1968] ss:$9 sm:$0xff] %v1956
  %2251 = vst [vmem:[%s1970] ss:$9 sm:$0xff] %v1957
  %2252 = vst [vmem:[%s1972] ss:$9 sm:$0xff] %v1958
  %v2253 = vld [vmem:[#allocation1] sm:$0xff]
  %2254 = vset.pattern.permute.xlu0 0
  %2255 = vperm.xlu0 %2254, %v1974
  %v2256 = vpop.permute.xlu0 %2255
  %2257 = vset.pattern.permute.xlu0 0
  %2258 = vperm.xlu0 %2257, %v1983
  %v2259 = vpop.permute.xlu0 %2258
  %2260 = vset.pattern.permute.xlu0 0
  %2261 = vperm.xlu0 %2260, %v1992
  %v2262 = vpop.permute.xlu0 %2261
  %2263 = vset.pattern.permute.xlu0 0
  %2264 = vperm.xlu0 %2263, %v2001
  %v2265 = vpop.permute.xlu0 %2264
  %2266 = vset.pattern.permute.xlu0 0
  %2267 = vperm.xlu0 %2266, %v2010
  %v2268 = vpop.permute.xlu0 %2267
  %2269 = vset.pattern.permute.xlu0 0
  %2270 = vperm.xlu0 %2269, %v2019
  %v2271 = vpop.permute.xlu0 %2270
  %2272 = vset.pattern.permute.xlu0 0
  %2273 = vperm.xlu0 %2272, %v2028
  %v2274 = vpop.permute.xlu0 %2273
  %2275 = vset.pattern.permute.xlu0 0
  %2276 = vperm.xlu0 %2275, %v2037
  %v2277 = vpop.permute.xlu0 %2276
  %2278 = vset.pattern.permute.xlu0 0
  %2279 = vperm.xlu0 %2278, %v2046
  %v2280 = vpop.permute.xlu0 %2279
  %2281 = vset.pattern.permute.xlu0 0
  %2282 = vperm.xlu0 %2281, %v2055
  %v2283 = vpop.permute.xlu0 %2282
  %2284 = vset.pattern.permute.xlu0 0
  %2285 = vperm.xlu0 %2284, %v2064
  %v2286 = vpop.permute.xlu0 %2285
  %2287 = vset.pattern.permute.xlu0 0
  %2288 = vperm.xlu0 %2287, %v2073
  %v2289 = vpop.permute.xlu0 %2288
  %2290 = vset.pattern.permute.xlu0 0
  %2291 = vperm.xlu0 %2290, %v2082
  %v2292 = vpop.permute.xlu0 %2291
  %2293 = vset.pattern.permute.xlu0 0
  %2294 = vperm.xlu0 %2293, %v2091
  %v2295 = vpop.permute.xlu0 %2294
  %2296 = vset.pattern.permute.xlu0 0
  %2297 = vperm.xlu0 %2296, %v2100
  %v2298 = vpop.permute.xlu0 %2297
  %2299 = vset.pattern.permute.xlu0 0
  %2300 = vperm.xlu0 %2299, %v2109
  %v2301 = vpop.permute.xlu0 %2300
  %2302 = vset.pattern.permute.xlu0 0
  %2303 = vperm.xlu0 %2302, %v2118
  %v2304 = vpop.permute.xlu0 %2303
  %2305 = vset.pattern.permute.xlu0 0
  %2306 = vperm.xlu0 %2305, %v2127
  %v2307 = vpop.permute.xlu0 %2306
  %2308 = vset.pattern.permute.xlu0 0
  %2309 = vperm.xlu0 %2308, %v2136
  %v2310 = vpop.permute.xlu0 %2309
  %2311 = vset.pattern.permute.xlu0 0
  %2312 = vperm.xlu0 %2311, %v2145
  %v2313 = vpop.permute.xlu0 %2312
  %2314 = vset.pattern.permute.xlu0 0
  %2315 = vperm.xlu0 %2314, %v2154
  %v2316 = vpop.permute.xlu0 %2315
  %2317 = vset.pattern.permute.xlu0 0
  %2318 = vperm.xlu0 %2317, %v2163
  %v2319 = vpop.permute.xlu0 %2318
  %2320 = vset.pattern.permute.xlu0 0
  %2321 = vperm.xlu0 %2320, %v2172
  %v2322 = vpop.permute.xlu0 %2321
  %2323 = vset.pattern.permute.xlu0 0
  %2324 = vperm.xlu0 %2323, %v2181
  %v2325 = vpop.permute.xlu0 %2324
  %2326 = vset.pattern.permute.xlu0 0
  %2327 = vperm.xlu0 %2326, %v2190
  %v2328 = vpop.permute.xlu0 %2327
  %2329 = vset.pattern.permute.xlu0 0
  %2330 = vperm.xlu0 %2329, %v2199
  %v2331 = vpop.permute.xlu0 %2330
  %2332 = vset.pattern.permute.xlu0 0
  %2333 = vperm.xlu0 %2332, %v2208
  %v2334 = vpop.permute.xlu0 %2333
  %2335 = vset.pattern.permute.xlu0 0
  %2336 = vperm.xlu0 %2335, %v2217
  %v2337 = vpop.permute.xlu0 %2336
  %2338 = vset.pattern.permute.xlu0 0
  %2339 = vperm.xlu0 %2338, %v2226
  %v2340 = vpop.permute.xlu0 %2339
  %2341 = vset.pattern.permute.xlu0 0
  %2342 = vperm.xlu0 %2341, %v2235
  %v2343 = vpop.permute.xlu0 %2342
  %2344 = vset.pattern.permute.xlu0 0
  %2345 = vperm.xlu0 %2344, %v2244
  %v2346 = vpop.permute.xlu0 %2345
  %2347 = vset.pattern.permute.xlu0 0
  %2348 = vperm.xlu0 %2347, %v2253
  %v2349 = vpop.permute.xlu0 %2348
  %v2350 = vperm.slane %v2256, %v1407
  %v2351 = vperm.slane %v2259, %v1409
  %v2352 = vsel %vm1411, %v2351, %v2350
  %v2353 = vperm.slane %v2262, %v1413
  %v2354 = vsel %vm1415, %v2353, %v2352
  %v2355 = vperm.slane %v2265, %v1417
  %v2356 = vsel %vm1419, %v2355, %v2354
  %v2357 = vperm.slane %v2268, %v1421
  %v2358 = vsel %vm1423, %v2357, %v2356
  %v2359 = vperm.slane %v2271, %v1425
  %v2360 = vsel %vm1427, %v2359, %v2358
  %v2361 = vperm.slane %v2274, %v1429
  %v2362 = vsel %vm1431, %v2361, %v2360
  %v2363 = vperm.slane %v2277, %v1433
  %v2364 = vsel %vm1435, %v2363, %v2362
  %v2365 = vperm.slane %v2280, %v1437
  %v2366 = vsel %vm1439, %v2365, %v2364
  %v2367 = vperm.slane %v2283, %v1441
  %v2368 = vsel %vm1443, %v2367, %v2366
  %v2369 = vperm.slane %v2286, %v1445
  %v2370 = vsel %vm1447, %v2369, %v2368
  %v2371 = vperm.slane %v2289, %v1449
  %v2372 = vsel %vm1451, %v2371, %v2370
  %v2373 = vperm.slane %v2292, %v1453
  %v2374 = vsel %vm1455, %v2373, %v2372
  %v2375 = vperm.slane %v2295, %v1457
  %v2376 = vsel %vm1459, %v2375, %v2374
  %v2377 = vperm.slane %v2298, %v1461
  %v2378 = vsel %vm1463, %v2377, %v2376
  %v2379 = vperm.slane %v2301, %v1465
  %v2380 = vsel %vm1467, %v2379, %v2378
  %v2381 = vperm.slane %v2304, %v1407
  %v2382 = vperm.slane %v2307, %v1409
  %v2383 = vsel %vm1411, %v2382, %v2381
  %v2384 = vperm.slane %v2310, %v1413
  %v2385 = vsel %vm1415, %v2384, %v2383
  %v2386 = vperm.slane %v2313, %v1417
  %v2387 = vsel %vm1419, %v2386, %v2385
  %v2388 = vperm.slane %v2316, %v1421
  %v2389 = vsel %vm1423, %v2388, %v2387
  %v2390 = vperm.slane %v2319, %v1425
  %v2391 = vsel %vm1427, %v2390, %v2389
  %v2392 = vperm.slane %v2322, %v1429
  %v2393 = vsel %vm1431, %v2392, %v2391
  %v2394 = vperm.slane %v2325, %v1433
  %v2395 = vsel %vm1435, %v2394, %v2393
  %v2396 = vperm.slane %v2328, %v1437
  %v2397 = vsel %vm1439, %v2396, %v2395
  %v2398 = vperm.slane %v2331, %v1441
  %v2399 = vsel %vm1443, %v2398, %v2397
  %v2400 = vperm.slane %v2334, %v1445
  %v2401 = vsel %vm1447, %v2400, %v2399
  %v2402 = vperm.slane %v2337, %v1449
  %v2403 = vsel %vm1451, %v2402, %v2401
  %v2404 = vperm.slane %v2340, %v1453
  %v2405 = vsel %vm1455, %v2404, %v2403
  %v2406 = vperm.slane %v2343, %v1457
  %v2407 = vsel %vm1459, %v2406, %v2405
  %v2408 = vperm.slane %v2346, %v1461
  %v2409 = vsel %vm1463, %v2408, %v2407
  %v2410 = vperm.slane %v2349, %v1465
  %v2411 = vsel %vm1467, %v2410, %v2409
  %v2412 = vrot.slane %v2411, 7
  %v2413 = vsel %vm155, %v2380, %v2412
  %2414 = vst.msk [vmem:[#allocation3] sm:$0x3] %vm1506, %v2413
  // Predicated region
  $region14: #{quantizer_forward.1} parent=0 // pred_check
    %p2415 = pneg %p11
  $region15: #{quantizer_forward.1} parent=0 // pred_check_branch
    %2417 = sbr.rel (%p2415) target = $region17
  $region16: #{quantizer_forward.1} parent=0 // pred_region
    %v2418 = vld [vmem:[#allocation3] sm:$0x3]
    %2419 = vst.msk [vmem:[%s2] sm:$0x3] %vm1506, %v2418
  $region17: #{quantizer_forward.1} parent=0 // pred_fallthru
    _
  // Predicated region
  $region18: #{quantizer_forward.1} parent=0 // pred_check
    _
  $region19: #{quantizer_forward.1} parent=0 // pred_check_branch
    %2421 = sbr.rel (0) target = $region21
  $region20: #{quantizer_forward.1} parent=0 // pred_region
    _
  $region21: #{quantizer_forward.1} parent=0 // pred_fallthru
    _
  // Predicated region
  $region22: #{quantizer_forward.1} parent=0 // pred_check
    _
  $region23: #{quantizer_forward.1} parent=0 // pred_check_branch
    %2423 = sbr.rel (0) target = $region25
  $region24: #{quantizer_forward.1} parent=0 // pred_region
    _
  $region25: #{quantizer_forward.1} parent=0 // pred_fallthru
    _

</llo_original>
